<compile_context>
chip_gen: v7x
topology: tpu7x:2x2x1
jax: 0.10.0
libtpu: 0.0.40
codegen_flags: <defaults>
</compile_context>

<pallas_src>
import jax
import jax.numpy as jnp
from jax.experimental import pallas as pl
from jax.experimental.pallas import tpu as pltpu


def _leaky_relu(x, slope=0.2):
    return jnp.where(x > 0, x, slope * x)


def discriminator_kernel(xt_ref, w1t_ref, b1_ref, w2t_ref, b2_ref, w3_ref,
                         b3_ref, o_ref):
    """Fused 3-layer MLP, transposed layout (frames on lanes).

    xt:  (D_IN, TILE_B)  f32   -- spectrogram frames, feature-major
    w1t: (H, D_IN)       bf16
    b1:  (H, 1)          f32
    w2t: (H, H)          bf16
    b2:  (H, 1)          f32
    w3:  (H, 1)          f32   -- final layer used as a VPU reduction weight
    b3:  (1,)            f32   -- SMEM scalar
    out: (1, TILE_B)     f32   -- lane-dense sigmoid probabilities
    """
    xt = xt_ref[...].astype(jnp.bfloat16)

    # Layer 1: (H, D_IN) @ (D_IN, TILE_B) -> (H, TILE_B), f32 accumulation.
    h1 = jnp.dot(w1t_ref[...], xt, preferred_element_type=jnp.float32)
    h1 = _leaky_relu(h1 + b1_ref[...])

    # Layer 2: (H, H) @ (H, TILE_B) -> (H, TILE_B).
    h2 = jnp.dot(w2t_ref[...], h1.astype(jnp.bfloat16),
                 preferred_element_type=jnp.float32)
    h2 = _leaky_relu(h2 + b2_ref[...])

    # Layer 3 (H -> 1): VPU multiply + sublane reduction instead of a
    # degenerate N=1 MXU matmul.  Result is already a lane-dense (1, TILE_B).
    logits = jnp.sum(h2 * w3_ref[...], axis=0, keepdims=True) + b3_ref[0]
    o_ref[...] = jax.nn.sigmoid(logits)


def discriminator_forward(x, params, *, tile_b=512):
    """x: (B, D_IN) f32 spectrogram frames -> (B, 1) probabilities."""
    w1, b1, w2, b2, w3, b3 = params
    B, d_in = x.shape
    H = w1.shape[1]

    tile_b = max(128, min(int(tile_b), 2048))
    n_tiles = pl.cdiv(B, tile_b)
    b_pad = n_tiles * tile_b

    # Wrapper-side layout plumbing: pad batch, put frames on the lane axis.
    x_pad = jnp.pad(x, ((0, b_pad - B), (0, 0)))
    xt = x_pad.T                                        # (D_IN, B_pad)

    w1t = w1.T.astype(jnp.bfloat16)                     # (H, D_IN)
    w2t = w2.T.astype(jnp.bfloat16)                     # (H, H)
    b1c = b1.reshape(H, 1).astype(jnp.float32)
    b2c = b2.reshape(H, 1).astype(jnp.float32)
    w3c = w3.reshape(H, 1).astype(jnp.float32)
    b3s = b3.reshape(1).astype(jnp.float32)

    out_row = pl.pallas_call(
        discriminator_kernel,
        out_shape=jax.ShapeDtypeStruct((1, b_pad), jnp.float32),
        grid=(n_tiles,),
        in_specs=[
            pl.BlockSpec((d_in, tile_b), lambda i: (0, i)),      # x tile
            pl.BlockSpec((H, d_in), lambda i: (0, 0)),           # w1t (resident)
            pl.BlockSpec((H, 1), lambda i: (0, 0)),              # b1
            pl.BlockSpec((H, H), lambda i: (0, 0)),              # w2t (resident)
            pl.BlockSpec((H, 1), lambda i: (0, 0)),              # b2
            pl.BlockSpec((H, 1), lambda i: (0, 0)),              # w3
            pl.BlockSpec(memory_space=pltpu.MemorySpace.SMEM),   # b3 scalar
        ],
        out_specs=pl.BlockSpec((1, tile_b), lambda i: (0, i)),   # lane-dense row
        compiler_params=pltpu.CompilerParams(
            dimension_semantics=("parallel",)),
    )(xt, w1t, b1c, w2t, b2c, w3c, b3s)

    return out_row[0, :B].reshape(B, 1)


def init_params(key, d_in, hidden):
    """Deterministic synthetic parameter init (uniform, PyTorch-Linear-style)."""
    ks = jax.random.split(key, 6)

    def lin(kw, kb, fan_in, fan_out):
        bound = 1.0 / jnp.sqrt(jnp.float32(fan_in))
        w = jax.random.uniform(kw, (fan_in, fan_out), jnp.float32, -bound, bound)
        b = jax.random.uniform(kb, (fan_out,), jnp.float32, -bound, bound)
        return w, b

    w1, b1 = lin(ks[0], ks[1], d_in, hidden)
    w2, b2 = lin(ks[2], ks[3], hidden, hidden)
    w3, b3 = lin(ks[4], ks[5], hidden, 1)
    return (w1, b1, w2, b2, w3, b3)


def reference_forward(x, params):
    """Pure-JAX f32 reference (documented semantics)."""
    w1, b1, w2, b2, w3, b3 = params
    h1 = _leaky_relu(x @ w1 + b1)
    h2 = _leaky_relu(h1 @ w2 + b2)
    return jax.nn.sigmoid(h2 @ w3 + b3)


def reference_forward_mixed(x, params):
    """Reference matching the kernel's bf16-matmul / f32-accumulate semantics."""
    w1, b1, w2, b2, w3, b3 = params

    def mm(a, b):
        return jnp.dot(a.astype(jnp.bfloat16), b.astype(jnp.bfloat16),
                       preferred_element_type=jnp.float32)

    h1 = _leaky_relu(mm(x, w1) + b1)
    h2 = _leaky_relu(mm(h1, w2) + b2)
    return jax.nn.sigmoid(h2 @ w3 + b3)


if __name__ == "__main__":
    key = jax.random.PRNGKey(0)
    k_x, k_p = jax.random.split(key)

    # Small but TPU-friendly shapes: 1000 spectrogram frames, 128 freq bins,
    # hidden width 128 (full lane width per the perf review).
    B, D_IN, HIDDEN = 1000, 128, 128
    x = jax.random.normal(k_x, (B, D_IN), jnp.float32)
    params = init_params(k_p, D_IN, HIDDEN)

    out = discriminator_forward(x, params, tile_b=512)
    out = jax.block_until_ready(out)
    assert out.shape == (B, 1)

    ref_mixed = reference_forward_mixed(x, params)   # same mixed precision
    ref_f32 = reference_forward(x, params)           # pure f32 sanity check
    assert jnp.allclose(out, ref_mixed, atol=1e-3, rtol=1e-3), (
        float(jnp.max(jnp.abs(out - ref_mixed))))
    assert jnp.allclose(out, ref_f32, atol=5e-2), (
        float(jnp.max(jnp.abs(out - ref_f32))))

    print("KERNEL_OK")
</pallas_src>

<mosaic_0001>
module attributes {stable_mosaic.version = 11 : i64} {
  func.func @discriminator_kernel(%arg0: i32, %arg1: memref<128x512xf32, #tpu.memory_space<vmem>>, %arg2: memref<128x128xbf16, #tpu.memory_space<vmem>>, %arg3: memref<128x1xf32, #tpu.memory_space<vmem>>, %arg4: memref<128x128xbf16, #tpu.memory_space<vmem>>, %arg5: memref<128x1xf32, #tpu.memory_space<vmem>>, %arg6: memref<128x1xf32, #tpu.memory_space<vmem>>, %arg7: memref<1xf32, #tpu.memory_space<smem>>, %arg8: memref<1x512xf32, #tpu.memory_space<vmem>>) attributes {dimension_semantics = [#tpu.dimension_semantics<parallel>], iteration_bounds = array<i64: 2>, scalar_prefetch = 0 : i64, scratch_operands = 0 : i64, tpu.core_type = #tpu.core_type<tc>, window_params = [{transform_indices = @transform_0, window_bounds = array<i64: 128, 512>}, {pipeline_mode = #tpu.pipeline_mode<synchronous>, transform_indices = @transform_1, window_bounds = array<i64: 128, 128>}, {pipeline_mode = #tpu.pipeline_mode<synchronous>, transform_indices = @transform_2, window_bounds = array<i64: 128, 1>}, {pipeline_mode = #tpu.pipeline_mode<synchronous>, transform_indices = @transform_3, window_bounds = array<i64: 128, 128>}, {pipeline_mode = #tpu.pipeline_mode<synchronous>, transform_indices = @transform_4, window_bounds = array<i64: 128, 1>}, {pipeline_mode = #tpu.pipeline_mode<synchronous>, transform_indices = @transform_5, window_bounds = array<i64: 128, 1>}, {transform_indices = @transform_6, window_bounds = array<i64: 1>}, {transform_indices = @transform_7, window_bounds = array<i64: 1, 512>}]} {
    %c0 = arith.constant 0 : index
    %c0_0 = arith.constant 0 : index
    %0 = vector.load %arg1[%c0, %c0_0] : memref<128x512xf32, #tpu.memory_space<vmem>>, vector<128x512xf32>
    %1 = arith.truncf %0 : vector<128x512xf32> to vector<128x512xbf16>
    %c0_1 = arith.constant 0 : index
    %c0_2 = arith.constant 0 : index
    %2 = vector.load %arg2[%c0_1, %c0_2] : memref<128x128xbf16, #tpu.memory_space<vmem>>, vector<128x128xbf16>
    %cst = arith.constant dense<0.000000e+00> : vector<128x512xf32>
    %3 = tpu.matmul %2, %1, %cst {dimension_numbers = #tpu.dot_dimension_numbers<[1], [0], [0], [1], [0, 0, 1, 1], [], []>} : vector<128x128xbf16>, vector<128x512xbf16>, vector<128x512xf32> -> vector<128x512xf32>
    %c0_3 = arith.constant 0 : index
    %c0_4 = arith.constant 0 : index
    %4 = vector.load %arg3[%c0_3, %c0_4] : memref<128x1xf32, #tpu.memory_space<vmem>>, vector<128x1xf32>
    %5 = vector.broadcast %4 : vector<128x1xf32> to vector<128x512xf32>
    %6 = arith.addf %3, %5 : vector<128x512xf32>
    %cst_5 = arith.constant 0.000000e+00 : f32
    %7 = vector.broadcast %cst_5 : f32 to vector<128x512xf32>
    %8 = arith.cmpf ogt, %6, %7 : vector<128x512xf32>
    %cst_6 = arith.constant 2.000000e-01 : f32
    %9 = vector.broadcast %cst_6 : f32 to vector<128x512xf32>
    %10 = arith.mulf %9, %6 : vector<128x512xf32>
    %11 = arith.select %8, %6, %10 : vector<128x512xi1>, vector<128x512xf32>
    %c0_7 = arith.constant 0 : index
    %c0_8 = arith.constant 0 : index
    %12 = vector.load %arg4[%c0_7, %c0_8] : memref<128x128xbf16, #tpu.memory_space<vmem>>, vector<128x128xbf16>
    %13 = arith.truncf %11 : vector<128x512xf32> to vector<128x512xbf16>
    %cst_9 = arith.constant dense<0.000000e+00> : vector<128x512xf32>
    %14 = tpu.matmul %12, %13, %cst_9 {dimension_numbers = #tpu.dot_dimension_numbers<[1], [0], [0], [1], [0, 0, 1, 1], [], []>} : vector<128x128xbf16>, vector<128x512xbf16>, vector<128x512xf32> -> vector<128x512xf32>
    %c0_10 = arith.constant 0 : index
    %c0_11 = arith.constant 0 : index
    %15 = vector.load %arg5[%c0_10, %c0_11] : memref<128x1xf32, #tpu.memory_space<vmem>>, vector<128x1xf32>
    %16 = vector.broadcast %15 : vector<128x1xf32> to vector<128x512xf32>
    %17 = arith.addf %14, %16 : vector<128x512xf32>
    %cst_12 = arith.constant 0.000000e+00 : f32
    %18 = vector.broadcast %cst_12 : f32 to vector<128x512xf32>
    %19 = arith.cmpf ogt, %17, %18 : vector<128x512xf32>
    %cst_13 = arith.constant 2.000000e-01 : f32
    %20 = vector.broadcast %cst_13 : f32 to vector<128x512xf32>
    %21 = arith.mulf %20, %17 : vector<128x512xf32>
    %22 = arith.select %19, %17, %21 : vector<128x512xi1>, vector<128x512xf32>
    %c0_14 = arith.constant 0 : index
    %c0_15 = arith.constant 0 : index
    %23 = vector.load %arg6[%c0_14, %c0_15] : memref<128x1xf32, #tpu.memory_space<vmem>>, vector<128x1xf32>
    %24 = vector.broadcast %23 : vector<128x1xf32> to vector<128x512xf32>
    %25 = arith.mulf %22, %24 : vector<128x512xf32>
    %cst_16 = arith.constant dense<0.000000e+00> : vector<512xf32>
    %26 = vector.multi_reduction <add>, %25, %cst_16 [0] : vector<128x512xf32> to vector<512xf32>
    %27 = vector.shape_cast %26 : vector<512xf32> to vector<1x512xf32>
    %c0_17 = arith.constant 0 : index
    %28 = memref.load %arg7[%c0_17] : memref<1xf32, #tpu.memory_space<smem>>
    %29 = vector.broadcast %28 : f32 to vector<1x512xf32>
    %30 = arith.addf %27, %29 : vector<1x512xf32>
    %31 = arith.negf %30 : vector<1x512xf32>
    %32 = math.exp %31 : vector<1x512xf32>
    %cst_18 = arith.constant 1.000000e+00 : f32
    %33 = vector.broadcast %cst_18 : f32 to vector<1x512xf32>
    %34 = arith.addf %33, %32 : vector<1x512xf32>
    %35 = arith.divf %33, %34 : vector<1x512xf32>
    %c0_19 = arith.constant 0 : index
    %c0_20 = arith.constant 0 : index
    %36 = vector.load %arg8[%c0_19, %c0_20] : memref<1x512xf32, #tpu.memory_space<vmem>>, vector<1x512xf32>
    tpu.vector_store %arg8[%c0_19, %c0_20], %35 {strides = array<i32>} : memref<1x512xf32, #tpu.memory_space<vmem>>, vector<1x512xf32>,
    return
  }
  func.func @transform_0(%arg0: i32) -> (i32, i32) {
    %c0_i32 = arith.constant 0 : i32
    %c0_i32_0 = arith.constant 0 : i32
    return %c0_i32, %arg0 : i32, i32
  }
  func.func @transform_1(%arg0: i32) -> (i32, i32) {
    %c0_i32 = arith.constant 0 : i32
    %c0_i32_0 = arith.constant 0 : i32
    %c0_i32_1 = arith.constant 0 : i32
    return %c0_i32, %c0_i32_0 : i32, i32
  }
  func.func @transform_2(%arg0: i32) -> (i32, i32) {
    %c0_i32 = arith.constant 0 : i32
    %c0_i32_0 = arith.constant 0 : i32
    %c0_i32_1 = arith.constant 0 : i32
    return %c0_i32, %c0_i32_0 : i32, i32
  }
  func.func @transform_3(%arg0: i32) -> (i32, i32) {
    %c0_i32 = arith.constant 0 : i32
    %c0_i32_0 = arith.constant 0 : i32
    %c0_i32_1 = arith.constant 0 : i32
    return %c0_i32, %c0_i32_0 : i32, i32
  }
  func.func @transform_4(%arg0: i32) -> (i32, i32) {
    %c0_i32 = arith.constant 0 : i32
    %c0_i32_0 = arith.constant 0 : i32
    %c0_i32_1 = arith.constant 0 : i32
    return %c0_i32, %c0_i32_0 : i32, i32
  }
  func.func @transform_5(%arg0: i32) -> (i32, i32) {
    %c0_i32 = arith.constant 0 : i32
    %c0_i32_0 = arith.constant 0 : i32
    %c0_i32_1 = arith.constant 0 : i32
    return %c0_i32, %c0_i32_0 : i32, i32
  }
  func.func @transform_6(%arg0: i32) -> i32 {
    %c0_i32 = arith.constant 0 : i32
    %c0_i32_0 = arith.constant 0 : i32
    return %c0_i32 : i32
  }
  func.func @transform_7(%arg0: i32) -> (i32, i32) {
    %c0_i32 = arith.constant 0 : i32
    %c0_i32_0 = arith.constant 0 : i32
    return %c0_i32, %arg0 : i32, i32
  }
}

</mosaic_0001>

<llo_original>
// kernel: tpu_custom_call.1
$region0: #{tpu_custom_call.1}
  #allocation0 [shape = 'u32[]', space=smem, size = 0x4, offset = 0x4, fixed_abs, tag = 'smem constant byte address 0x4 - core index']
  #allocation1 [shape = 'u32[144,128]{1,0:T(1,128)}', space=vmem, size = 0x12000, scoped, tag = 'internal scratch']
  #allocation2 [shape = 'f32[1]{0:T(128)S(6)}', space=smem, size = 0x200, scoped, tag = 'scoped memory for tpu_custom_call.1']
  %s0 = inlined_call_operand.hbm [shape: f32[128,1024], index: 0, kind: input, shape index: {}]
  %s1 = inlined_call_operand.vmem [shape: bf16[128,128], index: 1, kind: input, shape index: {}]
  %s2 = inlined_call_operand.vmem [shape: f32[128,1], index: 2, kind: input, shape index: {}]
  %s3 = inlined_call_operand.vmem [shape: bf16[128,128], index: 3, kind: input, shape index: {}]
  %s4 = inlined_call_operand.vmem [shape: f32[128,1], index: 4, kind: input, shape index: {}]
  %s5 = inlined_call_operand.vmem [shape: f32[128,1], index: 5, kind: input, shape index: {}]
  %s6 = inlined_call_operand.<no memory space> [shape: f32[1], index: 6, kind: input, shape index: {}]
  %s7 = inlined_call_operand.hbm [shape: f32[1,1024], index: 7, kind: output, shape index: {}]
  %s8 = sld [smem:[#allocation0]]
  $region65: #{tpu_custom_call.1} parent=0
    _
  %s10 = ssub.s32 1, %s8
  %s11 = scalar_select 0, %s10, %s8
  %12 = sst [smem:[#allocation2]] %s6
  $region1: #{tpu_custom_call.1} parent=0
    #allocation3 [shape = 'u8[524288]{0}', space=vmem, size = 0x80000, scoped, tag = 'input window, operand 0']
    #allocation4 [shape = 's32[2]{0}', space=sflag, size = 0x8, scoped, tag = 'scoped memory for tpu_custom_call.1']
    #allocation5 [shape = 's32[2]{0}', space=sflag, size = 0x8, scoped, tag = 'scoped memory for tpu_custom_call.1']
    #allocation6 [shape = 'u8[4096]{0}', space=vmem, size = 0x1000, scoped, tag = 'output window, operand 0']
    %13 = vsyncpa [#allocation4], 0
    %s14 = scalar_lea.sflag [#allocation4], 1
    %15 = vsyncpa %s14, 0
    %16 = vsyncpa [#allocation5], 0
    %s17 = scalar_lea.sflag [#allocation5], 1
    %18 = vsyncpa %s17, 0
    loop: start=0, step=1, limit=4
    $region2: #{tpu_custom_call.1} parent=1 // loop_pre_header
      _
    $region3: #{tpu_custom_call.1} parent=1 // loop_header
      %s20 = sphi 0, %s24
      %p21 = scmp.ge.s32.totalorder %s20, 4
      %s30 = sphi 0, %s32
      %s33 = sphi 0, %s30
      %s34 = sphi 0, %s33
      %s50 = sphi 0, %s34
      %s54 = sphi 0, %s54
      %s56 = sphi 0, %s54
      %s57 = sphi 0, %s56
      %s71 = sphi 0, %s57
      %s75 = sphi 0, %s75
      %s77 = sphi 0, %s75
      %s78 = sphi 0, %s77
      %s92 = sphi 0, %s78
      %s96 = sphi 0, %s96
      %s98 = sphi 0, %s96
      %s99 = sphi 0, %s98
      %s113 = sphi 0, %s99
      %s117 = sphi 0, %s117
      %s119 = sphi 0, %s117
      %s120 = sphi 0, %s119
      %s134 = sphi 0, %s120
      %s138 = sphi 0, %s138
      %s140 = sphi 0, %s138
      %s141 = sphi 0, %s140
      %s155 = sphi 0, %s141
      %s159 = sphi 0, %s159
      %s161 = sphi 0, %s159
      %s162 = sphi 0, %s161
      %s176 = sphi 0, %s162
      %s182 = sphi 0, %s184
      %s185 = sphi 0, %s182
      %s186 = sphi 0, %s185
      %s202 = sphi 0, %s186
    $region4: #{tpu_custom_call.1} parent=1 // loop_header_branch
      %23 = sbr.rel (%p21) target = $region8
    $region5: #{tpu_custom_call.1} parent=1 // loop_body
      %s25 = ssub.s32 %s20, 1
      %s26 = ssub.s32 %s20, 2
      %s27 = sadd.s32 %s20, 1
      %s28 = ssub.s32 %s20, %s27
      %p29 = scmp.eq.s32.totalorder %s28, 0
      %s31 = sadd.s32 %s30, 1
      %s32 = scalar_select %p29, %s30, %s31
      %p35 = pneg %p29
      %p36 = scmp.eq.s32.totalorder %s20, 1
      %p37 = por %p35, %p36
      %p38 = scmp.ne.s32.totalorder %s30, %s33
      %p39 = scmp.eq.s32.totalorder %s20, 0
      %p40 = por %p38, %p39
      %p41 = scmp.ne.s32.totalorder %s30, %s33
      %p42 = scmp.eq.s32.totalorder %s25, 1
      %p43 = por %p41, %p42
      %p44 = scmp.ne.s32.totalorder %s33, %s34
      %p45 = scmp.eq.s32.totalorder %s25, 0
      %p46 = por %p44, %p45
      %p47 = scmp.ne.s32.totalorder %s33, %s34
      %p48 = scmp.eq.s32.totalorder %s26, 1
      %p49 = por %p47, %p48
      %p51 = scmp.ne.s32.totalorder %s34, %s50
      %p52 = scmp.eq.s32.totalorder %s26, 0
      %p53 = por %p51, %p52
      %s55 = sadd.s32 %s54, 1
      %p58 = scmp.eq.s32.totalorder %s20, 1
      %p59 = scmp.ne.s32.totalorder %s54, %s56
      %p60 = scmp.eq.s32.totalorder %s20, 0
      %p61 = por %p59, %p60
      %p62 = scmp.ne.s32.totalorder %s54, %s56
      %p63 = scmp.eq.s32.totalorder %s25, 1
      %p64 = por %p62, %p63
      %p65 = scmp.ne.s32.totalorder %s56, %s57
      %p66 = scmp.eq.s32.totalorder %s25, 0
      %p67 = por %p65, %p66
      %p68 = scmp.ne.s32.totalorder %s56, %s57
      %p69 = scmp.eq.s32.totalorder %s26, 1
      %p70 = por %p68, %p69
      %p72 = scmp.ne.s32.totalorder %s57, %s71
      %p73 = scmp.eq.s32.totalorder %s26, 0
      %p74 = por %p72, %p73
      %s76 = sadd.s32 %s75, 1
      %p79 = scmp.eq.s32.totalorder %s20, 1
      %p80 = scmp.ne.s32.totalorder %s75, %s77
      %p81 = scmp.eq.s32.totalorder %s20, 0
      %p82 = por %p80, %p81
      %p83 = scmp.ne.s32.totalorder %s75, %s77
      %p84 = scmp.eq.s32.totalorder %s25, 1
      %p85 = por %p83, %p84
      %p86 = scmp.ne.s32.totalorder %s77, %s78
      %p87 = scmp.eq.s32.totalorder %s25, 0
      %p88 = por %p86, %p87
      %p89 = scmp.ne.s32.totalorder %s77, %s78
      %p90 = scmp.eq.s32.totalorder %s26, 1
      %p91 = por %p89, %p90
      %p93 = scmp.ne.s32.totalorder %s78, %s92
      %p94 = scmp.eq.s32.totalorder %s26, 0
      %p95 = por %p93, %p94
      %s97 = sadd.s32 %s96, 1
      %p100 = scmp.eq.s32.totalorder %s20, 1
      %p101 = scmp.ne.s32.totalorder %s96, %s98
      %p102 = scmp.eq.s32.totalorder %s20, 0
      %p103 = por %p101, %p102
      %p104 = scmp.ne.s32.totalorder %s96, %s98
      %p105 = scmp.eq.s32.totalorder %s25, 1
      %p106 = por %p104, %p105
      %p107 = scmp.ne.s32.totalorder %s98, %s99
      %p108 = scmp.eq.s32.totalorder %s25, 0
      %p109 = por %p107, %p108
      %p110 = scmp.ne.s32.totalorder %s98, %s99
      %p111 = scmp.eq.s32.totalorder %s26, 1
      %p112 = por %p110, %p111
      %p114 = scmp.ne.s32.totalorder %s99, %s113
      %p115 = scmp.eq.s32.totalorder %s26, 0
      %p116 = por %p114, %p115
      %s118 = sadd.s32 %s117, 1
      %p121 = scmp.eq.s32.totalorder %s20, 1
      %p122 = scmp.ne.s32.totalorder %s117, %s119
      %p123 = scmp.eq.s32.totalorder %s20, 0
      %p124 = por %p122, %p123
      %p125 = scmp.ne.s32.totalorder %s117, %s119
      %p126 = scmp.eq.s32.totalorder %s25, 1
      %p127 = por %p125, %p126
      %p128 = scmp.ne.s32.totalorder %s119, %s120
      %p129 = scmp.eq.s32.totalorder %s25, 0
      %p130 = por %p128, %p129
      %p131 = scmp.ne.s32.totalorder %s119, %s120
      %p132 = scmp.eq.s32.totalorder %s26, 1
      %p133 = por %p131, %p132
      %p135 = scmp.ne.s32.totalorder %s120, %s134
      %p136 = scmp.eq.s32.totalorder %s26, 0
      %p137 = por %p135, %p136
      %s139 = sadd.s32 %s138, 1
      %p142 = scmp.eq.s32.totalorder %s20, 1
      %p143 = scmp.ne.s32.totalorder %s138, %s140
      %p144 = scmp.eq.s32.totalorder %s20, 0
      %p145 = por %p143, %p144
      %p146 = scmp.ne.s32.totalorder %s138, %s140
      %p147 = scmp.eq.s32.totalorder %s25, 1
      %p148 = por %p146, %p147
      %p149 = scmp.ne.s32.totalorder %s140, %s141
      %p150 = scmp.eq.s32.totalorder %s25, 0
      %p151 = por %p149, %p150
      %p152 = scmp.ne.s32.totalorder %s140, %s141
      %p153 = scmp.eq.s32.totalorder %s26, 1
      %p154 = por %p152, %p153
      %p156 = scmp.ne.s32.totalorder %s141, %s155
      %p157 = scmp.eq.s32.totalorder %s26, 0
      %p158 = por %p156, %p157
      %s160 = sadd.s32 %s159, 1
      %p163 = scmp.eq.s32.totalorder %s20, 1
      %p164 = scmp.ne.s32.totalorder %s159, %s161
      %p165 = scmp.eq.s32.totalorder %s20, 0
      %p166 = por %p164, %p165
      %p167 = scmp.ne.s32.totalorder %s159, %s161
      %p168 = scmp.eq.s32.totalorder %s25, 1
      %p169 = por %p167, %p168
      %p170 = scmp.ne.s32.totalorder %s161, %s162
      %p171 = scmp.eq.s32.totalorder %s25, 0
      %p172 = por %p170, %p171
      %p173 = scmp.ne.s32.totalorder %s161, %s162
      %p174 = scmp.eq.s32.totalorder %s26, 1
      %p175 = por %p173, %p174
      %p177 = scmp.ne.s32.totalorder %s162, %s176
      %p178 = scmp.eq.s32.totalorder %s26, 0
      %p179 = por %p177, %p178
      %s180 = ssub.s32 %s20, %s27
      %p181 = scmp.eq.s32.totalorder %s180, 0
      %s183 = sadd.s32 %s182, 1
      %s184 = scalar_select %p181, %s182, %s183
      %p187 = pneg %p181
      %p188 = scmp.eq.s32.totalorder %s20, 1
      %p189 = por %p187, %p188
      %p190 = scmp.ne.s32.totalorder %s182, %s185
      %p191 = scmp.eq.s32.totalorder %s20, 0
      %p192 = por %p190, %p191
      %p193 = scmp.ne.s32.totalorder %s182, %s185
      %p194 = scmp.eq.s32.totalorder %s25, 1
      %p195 = por %p193, %p194
      %p196 = scmp.ne.s32.totalorder %s185, %s186
      %p197 = scmp.eq.s32.totalorder %s25, 0
      %p198 = por %p196, %p197
      %p199 = scmp.ne.s32.totalorder %s185, %s186
      %p200 = scmp.eq.s32.totalorder %s26, 1
      %p201 = por %p199, %p200
      %p203 = scmp.ne.s32.totalorder %s186, %s202
      %p204 = scmp.eq.s32.totalorder %s26, 0
      %p205 = por %p203, %p204
      %p206 = scmp.le.s32.totalorder 1, %s20
      %p207 = scmp.lt.s32.totalorder %s20, 3
      %p208 = pnand %p206, %p207
      %p209 = pneg %p208
      // Predicated region
      $region9: #{tpu_custom_call.1} parent=5 // pred_check
        _
      $region10: #{tpu_custom_call.1} parent=5 // pred_check_branch
        %211 = sbr.rel (%p208) target = $region12
      $region11: #{tpu_custom_call.1} parent=5 // pred_region
        %s212 = ssub.s32 %s20, 1
        // Predicated region
        $region13: #{tpu_custom_call.1} parent=11 // pred_check
          %p213 = pneg %p67
        $region14: #{tpu_custom_call.1} parent=11 // pred_check_branch
          %215 = sbr.rel (%p213) target = $region16
        $region15: #{tpu_custom_call.1} parent=11 // pred_region
          _
        $region16: #{tpu_custom_call.1} parent=11 // pred_fallthru
          _
        // Predicated region
        $region17: #{tpu_custom_call.1} parent=11 // pred_check
          %p216 = pneg %p88
        $region18: #{tpu_custom_call.1} parent=11 // pred_check_branch
          %218 = sbr.rel (%p216) target = $region20
        $region19: #{tpu_custom_call.1} parent=11 // pred_region
          _
        $region20: #{tpu_custom_call.1} parent=11 // pred_fallthru
          _
        // Predicated region
        $region21: #{tpu_custom_call.1} parent=11 // pred_check
          %p219 = pneg %p109
        $region22: #{tpu_custom_call.1} parent=11 // pred_check_branch
          %221 = sbr.rel (%p219) target = $region24
        $region23: #{tpu_custom_call.1} parent=11 // pred_region
          _
        $region24: #{tpu_custom_call.1} parent=11 // pred_fallthru
          _
        // Predicated region
        $region25: #{tpu_custom_call.1} parent=11 // pred_check
          %p222 = pneg %p130
        $region26: #{tpu_custom_call.1} parent=11 // pred_check_branch
          %224 = sbr.rel (%p222) target = $region28
        $region27: #{tpu_custom_call.1} parent=11 // pred_region
          _
        $region28: #{tpu_custom_call.1} parent=11 // pred_fallthru
          _
        // Predicated region
        $region29: #{tpu_custom_call.1} parent=11 // pred_check
          %p225 = pneg %p151
        $region30: #{tpu_custom_call.1} parent=11 // pred_check_branch
          %227 = sbr.rel (%p225) target = $region32
        $region31: #{tpu_custom_call.1} parent=11 // pred_region
          _
        $region32: #{tpu_custom_call.1} parent=11 // pred_fallthru
          _
        // Predicated region
        $region33: #{tpu_custom_call.1} parent=11 // pred_check
          %p228 = pneg %p172
        $region34: #{tpu_custom_call.1} parent=11 // pred_check_branch
          %230 = sbr.rel (%p228) target = $region36
        $region35: #{tpu_custom_call.1} parent=11 // pred_region
          _
        $region36: #{tpu_custom_call.1} parent=11 // pred_fallthru
          _
      $region12: #{tpu_custom_call.1} parent=5 // pred_fallthru
        _
      %p231 = scmp.lt.s32.totalorder %s20, 2
      // Predicated region
      $region37: #{tpu_custom_call.1} parent=5 // pred_check
        %p232 = pneg %p231
      $region38: #{tpu_custom_call.1} parent=5 // pred_check_branch
        %234 = sbr.rel (%p232) target = $region40
      $region39: #{tpu_custom_call.1} parent=5 // pred_region
        // Predicated region
        $region41: #{tpu_custom_call.1} parent=39 // pred_check
          %p235 = pneg %p40
        $region42: #{tpu_custom_call.1} parent=39 // pred_check_branch
          %237 = sbr.rel (%p235) target = $region44
        $region43: #{tpu_custom_call.1} parent=39 // pred_region
          %s238 = sand.u32 %s30, 1
          %s239 = scalar_lea.sflag [#allocation4], %s238
          %s240 = sand.u32 %s30, 1
          %s241 = smul.addr %s240, 512
          %s242 = scalar_lea.vmem [#allocation3], %s241
          %s243 = smul.u32 4, %s20
          %s245 = ssub.s32 8192, 8192
          %246 = vsyncadd %s239, %s245
          %s247 = smul.addr %s243, 128
          %s248 = scalar_lea.hbm %s0, %s247
          %s249 = sshll.u32 %s242, 4
          %s250 = int_to_ptr.vmem [resolvable:$true] %s249
          %255 = dma.hbm_to_vmem [thread:$0]  %s248, 8192, %s250, %s239, 1024, 512, 32
        $region44: #{tpu_custom_call.1} parent=39 // pred_fallthru
          _
      $region40: #{tpu_custom_call.1} parent=5 // pred_fallthru
        _
      %p256 = scmp.le.s32.totalorder 1, %s20
      %p257 = scmp.lt.s32.totalorder %s20, 3
      %p258 = pnand %p256, %p257
      %p259 = pneg %p258
      // Predicated region
      $region45: #{tpu_custom_call.1} parent=5 // pred_check
        _
      $region46: #{tpu_custom_call.1} parent=5 // pred_check_branch
        %261 = sbr.rel (%p258) target = $region48
      $region47: #{tpu_custom_call.1} parent=5 // pred_region
        %s262 = ssub.s32 %s20, 1
        %s263 = sand.u32 %s33, 1
        %s264 = scalar_lea.sflag [#allocation4], %s263
        %s265 = sand.u32 %s33, 1
        %s266 = smul.addr %s265, 512
        %s267 = scalar_lea.vmem [#allocation3], %s266
        // Predicated region
        $region49: #{tpu_custom_call.1} parent=47 // pred_check
          %p268 = pneg %p46
        $region50: #{tpu_custom_call.1} parent=47 // pred_check_branch
          %270 = sbr.rel (%p268) target = $region52
        $region51: #{tpu_custom_call.1} parent=47 // pred_region
          %271 = dma.done %s264, 8192
        $region52: #{tpu_custom_call.1} parent=47 // pred_fallthru
          _
        %s272 = sand.u32 %s33, 1
        %s273 = scalar_lea.sflag [#allocation4], %s272
        %s274 = sand.u32 %s33, 1
        %s275 = smul.addr %s274, 512
        %s276 = scalar_lea.vmem [#allocation3], %s275
        %p277 = pneg %p46
        %p278 = pneg %p43
        %p279 = pneg %p67
        %p280 = pneg %p64
        %p281 = pneg %p88
        %p282 = pneg %p85
        %p283 = pneg %p109
        %p284 = pneg %p106
        %p285 = pneg %p130
        %p286 = pneg %p127
        %p287 = pneg %p151
        %p288 = pneg %p148
        %p289 = pneg %p172
        %p290 = pneg %p169
        %p291 = pneg %p198
        %p292 = pneg %p195
        %s293 = sand.u32 %s185, 1
        %s294 = scalar_lea.sflag [#allocation5], %s293
        %s295 = sand.u32 %s185, 1
        %s296 = smul.addr %s295, 4
        %s297 = scalar_lea.vmem [#allocation6], %s296
        %s298 = smul.u32 4, %s25
        %s299 = smul.u32 4, %s25
        %v301 = vld [vmem:[%s267] sm:$0xff]
        %v302 = vld [vmem:[%s267 + $0x8] sm:$0xff]
        %v303 = vld [vmem:[%s267 + $0x10] sm:$0xff]
        %v304 = vld [vmem:[%s267 + $0x18] sm:$0xff]
        %v305 = vld [vmem:[%s267 + $0x20] sm:$0xff]
        %v306 = vld [vmem:[%s267 + $0x28] sm:$0xff]
        %v307 = vld [vmem:[%s267 + $0x30] sm:$0xff]
        %v308 = vld [vmem:[%s267 + $0x38] sm:$0xff]
        %v309 = vld [vmem:[%s267 + $0x40] sm:$0xff]
        %v310 = vld [vmem:[%s267 + $0x48] sm:$0xff]
        %v311 = vld [vmem:[%s267 + $0x50] sm:$0xff]
        %v312 = vld [vmem:[%s267 + $0x58] sm:$0xff]
        %v313 = vld [vmem:[%s267 + $0x60] sm:$0xff]
        %v314 = vld [vmem:[%s267 + $0x68] sm:$0xff]
        %v315 = vld [vmem:[%s267 + $0x70] sm:$0xff]
        %v316 = vld [vmem:[%s267 + $0x78] sm:$0xff]
        %v317 = vld [vmem:[%s267 + $0x80] sm:$0xff]
        %v318 = vld [vmem:[%s267 + $0x88] sm:$0xff]
        %v319 = vld [vmem:[%s267 + $0x90] sm:$0xff]
        %v320 = vld [vmem:[%s267 + $0x98] sm:$0xff]
        %v321 = vld [vmem:[%s267 + $0xa0] sm:$0xff]
        %v322 = vld [vmem:[%s267 + $0xa8] sm:$0xff]
        %v323 = vld [vmem:[%s267 + $0xb0] sm:$0xff]
        %v324 = vld [vmem:[%s267 + $0xb8] sm:$0xff]
        %v325 = vld [vmem:[%s267 + $0xc0] sm:$0xff]
        %v326 = vld [vmem:[%s267 + $0xc8] sm:$0xff]
        %v327 = vld [vmem:[%s267 + $0xd0] sm:$0xff]
        %v328 = vld [vmem:[%s267 + $0xd8] sm:$0xff]
        %v329 = vld [vmem:[%s267 + $0xe0] sm:$0xff]
        %v330 = vld [vmem:[%s267 + $0xe8] sm:$0xff]
        %v331 = vld [vmem:[%s267 + $0xf0] sm:$0xff]
        %v332 = vld [vmem:[%s267 + $0xf8] sm:$0xff]
        %v333 = vld [vmem:[%s267 + $0x100] sm:$0xff]
        %v334 = vld [vmem:[%s267 + $0x108] sm:$0xff]
        %v335 = vld [vmem:[%s267 + $0x110] sm:$0xff]
        %v336 = vld [vmem:[%s267 + $0x118] sm:$0xff]
        %v337 = vld [vmem:[%s267 + $0x120] sm:$0xff]
        %v338 = vld [vmem:[%s267 + $0x128] sm:$0xff]
        %v339 = vld [vmem:[%s267 + $0x130] sm:$0xff]
        %v340 = vld [vmem:[%s267 + $0x138] sm:$0xff]
        %v341 = vld [vmem:[%s267 + $0x140] sm:$0xff]
        %v342 = vld [vmem:[%s267 + $0x148] sm:$0xff]
        %v343 = vld [vmem:[%s267 + $0x150] sm:$0xff]
        %v344 = vld [vmem:[%s267 + $0x158] sm:$0xff]
        %v345 = vld [vmem:[%s267 + $0x160] sm:$0xff]
        %v346 = vld [vmem:[%s267 + $0x168] sm:$0xff]
        %v347 = vld [vmem:[%s267 + $0x170] sm:$0xff]
        %v348 = vld [vmem:[%s267 + $0x178] sm:$0xff]
        %v349 = vld [vmem:[%s267 + $0x180] sm:$0xff]
        %v350 = vld [vmem:[%s267 + $0x188] sm:$0xff]
        %v351 = vld [vmem:[%s267 + $0x190] sm:$0xff]
        %v352 = vld [vmem:[%s267 + $0x198] sm:$0xff]
        %v353 = vld [vmem:[%s267 + $0x1a0] sm:$0xff]
        %v354 = vld [vmem:[%s267 + $0x1a8] sm:$0xff]
        %v355 = vld [vmem:[%s267 + $0x1b0] sm:$0xff]
        %v356 = vld [vmem:[%s267 + $0x1b8] sm:$0xff]
        %v357 = vld [vmem:[%s267 + $0x1c0] sm:$0xff]
        %v358 = vld [vmem:[%s267 + $0x1c8] sm:$0xff]
        %v359 = vld [vmem:[%s267 + $0x1d0] sm:$0xff]
        %v360 = vld [vmem:[%s267 + $0x1d8] sm:$0xff]
        %v361 = vld [vmem:[%s267 + $0x1e0] sm:$0xff]
        %v362 = vld [vmem:[%s267 + $0x1e8] sm:$0xff]
        %v363 = vld [vmem:[%s267 + $0x1f0] sm:$0xff]
        %v364 = vld [vmem:[%s267 + $0x1f8] sm:$0xff]
        %v365 = vpack.c.bf16 %v305, %v301
        %v366 = vpack.c.bf16 %v306, %v302
        %v367 = vpack.c.bf16 %v307, %v303
        %v368 = vpack.c.bf16 %v308, %v304
        %v369 = vpack.c.bf16 %v313, %v309
        %v370 = vpack.c.bf16 %v314, %v310
        %v371 = vpack.c.bf16 %v315, %v311
        %v372 = vpack.c.bf16 %v316, %v312
        %v373 = vpack.c.bf16 %v321, %v317
        %v374 = vpack.c.bf16 %v322, %v318
        %v375 = vpack.c.bf16 %v323, %v319
        %v376 = vpack.c.bf16 %v324, %v320
        %v377 = vpack.c.bf16 %v329, %v325
        %v378 = vpack.c.bf16 %v330, %v326
        %v379 = vpack.c.bf16 %v331, %v327
        %v380 = vpack.c.bf16 %v332, %v328
        %v381 = vpack.c.bf16 %v337, %v333
        %v382 = vpack.c.bf16 %v338, %v334
        %v383 = vpack.c.bf16 %v339, %v335
        %v384 = vpack.c.bf16 %v340, %v336
        %v385 = vpack.c.bf16 %v345, %v341
        %v386 = vpack.c.bf16 %v346, %v342
        %v387 = vpack.c.bf16 %v347, %v343
        %v388 = vpack.c.bf16 %v348, %v344
        %v389 = vpack.c.bf16 %v353, %v349
        %v390 = vpack.c.bf16 %v354, %v350
        %v391 = vpack.c.bf16 %v355, %v351
        %v392 = vpack.c.bf16 %v356, %v352
        %v393 = vpack.c.bf16 %v361, %v357
        %v394 = vpack.c.bf16 %v362, %v358
        %v395 = vpack.c.bf16 %v363, %v359
        %v396 = vpack.c.bf16 %v364, %v360
        %v397 = vld [vmem:[%s1] sm:$0xf]
        %v398 = vld [vmem:[%s1 + $0x4] sm:$0xf]
        %v399 = vld [vmem:[%s1 + $0x8] sm:$0xf]
        %v400 = vld [vmem:[%s1 + $0xc] sm:$0xf]
        %v401 = vld [vmem:[%s1 + $0x10] sm:$0xf]
        %v402 = vld [vmem:[%s1 + $0x14] sm:$0xf]
        %v403 = vld [vmem:[%s1 + $0x18] sm:$0xf]
        %v404 = vld [vmem:[%s1 + $0x1c] sm:$0xf]
        %v405 = vld [vmem:[%s1 + $0x20] sm:$0xf]
        %v406 = vld [vmem:[%s1 + $0x24] sm:$0xf]
        %v407 = vld [vmem:[%s1 + $0x28] sm:$0xf]
        %v408 = vld [vmem:[%s1 + $0x2c] sm:$0xf]
        %v409 = vld [vmem:[%s1 + $0x30] sm:$0xf]
        %v410 = vld [vmem:[%s1 + $0x34] sm:$0xf]
        %v411 = vld [vmem:[%s1 + $0x38] sm:$0xf]
        %v412 = vld [vmem:[%s1 + $0x3c] sm:$0xf]
        %v413 = vld [vmem:[%s2] sm:$0xff]
        %v414 = vld [vmem:[%s2 + $0x8] sm:$0xff]
        %v415 = vld [vmem:[%s2 + $0x10] sm:$0xff]
        %v416 = vld [vmem:[%s2 + $0x18] sm:$0xff]
        %v417 = vld [vmem:[%s2 + $0x20] sm:$0xff]
        %v418 = vld [vmem:[%s2 + $0x28] sm:$0xff]
        %v419 = vld [vmem:[%s2 + $0x30] sm:$0xff]
        %v420 = vld [vmem:[%s2 + $0x38] sm:$0xff]
        %v421 = vld [vmem:[%s2 + $0x40] sm:$0xff]
        %v422 = vld [vmem:[%s2 + $0x48] sm:$0xff]
        %v423 = vld [vmem:[%s2 + $0x50] sm:$0xff]
        %v424 = vld [vmem:[%s2 + $0x58] sm:$0xff]
        %v425 = vld [vmem:[%s2 + $0x60] sm:$0xff]
        %v426 = vld [vmem:[%s2 + $0x68] sm:$0xff]
        %v427 = vld [vmem:[%s2 + $0x70] sm:$0xff]
        %v428 = vld [vmem:[%s2 + $0x78] sm:$0xff]
        %430 = vset.pattern.permute.xlu0 0
        %431 = vperm.xlu0 %430, %v413
        %v432 = vpop.permute.xlu0 %431
        %435 = vset.pattern.permute.xlu0 0
        %436 = vperm.xlu0 %435, %v414
        %v437 = vpop.permute.xlu0 %436
        %440 = vset.pattern.permute.xlu0 0
        %441 = vperm.xlu0 %440, %v415
        %v442 = vpop.permute.xlu0 %441
        %445 = vset.pattern.permute.xlu0 0
        %446 = vperm.xlu0 %445, %v416
        %v447 = vpop.permute.xlu0 %446
        %450 = vset.pattern.permute.xlu0 0
        %451 = vperm.xlu0 %450, %v417
        %v452 = vpop.permute.xlu0 %451
        %455 = vset.pattern.permute.xlu0 0
        %456 = vperm.xlu0 %455, %v418
        %v457 = vpop.permute.xlu0 %456
        %460 = vset.pattern.permute.xlu0 0
        %461 = vperm.xlu0 %460, %v419
        %v462 = vpop.permute.xlu0 %461
        %465 = vset.pattern.permute.xlu0 0
        %466 = vperm.xlu0 %465, %v420
        %v467 = vpop.permute.xlu0 %466
        %470 = vset.pattern.permute.xlu0 0
        %471 = vperm.xlu0 %470, %v421
        %v472 = vpop.permute.xlu0 %471
        %475 = vset.pattern.permute.xlu0 0
        %476 = vperm.xlu0 %475, %v422
        %v477 = vpop.permute.xlu0 %476
        %480 = vset.pattern.permute.xlu0 0
        %481 = vperm.xlu0 %480, %v423
        %v482 = vpop.permute.xlu0 %481
        %485 = vset.pattern.permute.xlu0 0
        %486 = vperm.xlu0 %485, %v424
        %v487 = vpop.permute.xlu0 %486
        %490 = vset.pattern.permute.xlu0 0
        %491 = vperm.xlu0 %490, %v425
        %v492 = vpop.permute.xlu0 %491
        %495 = vset.pattern.permute.xlu0 0
        %496 = vperm.xlu0 %495, %v426
        %v497 = vpop.permute.xlu0 %496
        %500 = vset.pattern.permute.xlu0 0
        %501 = vperm.xlu0 %500, %v427
        %v502 = vpop.permute.xlu0 %501
        %505 = vset.pattern.permute.xlu0 0
        %506 = vperm.xlu0 %505, %v428
        %v507 = vpop.permute.xlu0 %506
        %v525 = vunpack.c.l.b16 %v397
        %v526 = vunpack.c.l.b16 %v398
        %v527 = vunpack.c.l.b16 %v399
        %v528 = vunpack.c.l.b16 %v400
        %v529 = vunpack.c.l.b16 %v401
        %v530 = vunpack.c.l.b16 %v402
        %v531 = vunpack.c.l.b16 %v403
        %v532 = vunpack.c.l.b16 %v404
        %v533 = vunpack.c.l.b16 %v405
        %v534 = vunpack.c.l.b16 %v406
        %v535 = vunpack.c.l.b16 %v407
        %v536 = vunpack.c.l.b16 %v408
        %v537 = vunpack.c.l.b16 %v409
        %v538 = vunpack.c.l.b16 %v410
        %v539 = vunpack.c.l.b16 %v411
        %v540 = vunpack.c.l.b16 %v412
        %v541 = vpack.c.b16 %v526, %v525
        %v542 = vpack.c.b16 %v528, %v527
        %v543 = vpack.c.b16 %v530, %v529
        %v544 = vpack.c.b16 %v532, %v531
        %v545 = vpack.c.b16 %v534, %v533
        %v546 = vpack.c.b16 %v536, %v535
        %v547 = vpack.c.b16 %v538, %v537
        %v548 = vpack.c.b16 %v540, %v539
        %557 = vmatprep.subr.bf16.mxu0 %v366
        %558 = vmatpush1.bf16.msra.mxu0 %v365
        %559 = vmatprep.subr.bf16.mxu0 %v370
        %560 = vmatpush1.bf16.msra.mxu0 %v369
        %561 = vmatprep.subr.bf16.mxu0 %v374
        %562 = vmatpush1.bf16.msra.mxu0 %v373
        %563 = vmatprep.subr.bf16.mxu0 %v378
        %564 = vmatpush1.bf16.msra.mxu0 %v377
        %565 = vmatprep.subr.bf16.mxu0 %v382
        %566 = vmatpush1.bf16.msra.mxu0 %v381
        %567 = vmatprep.subr.bf16.mxu0 %v386
        %568 = vmatpush1.bf16.msra.mxu0 %v385
        %569 = vmatprep.subr.bf16.mxu0 %v390
        %570 = vmatpush1.bf16.msra.mxu0 %v389
        %571 = vmatprep.subr.bf16.mxu0 %v394
        %572 = vmatpush1.bf16.msra.mxu0 %v393
        %573 = vmatprep.subr.bf16.mxu0 0
        %574 = vmatpush1.bf16.msra.mxu0 0
        %575 = vmatprep.subr.bf16.mxu0 0
        %576 = vmatpush1.bf16.msra.mxu0 0
        %577 = vmatprep.subr.bf16.mxu0 0
        %578 = vmatpush1.bf16.msra.mxu0 0
        %579 = vmatprep.subr.bf16.mxu0 0
        %580 = vmatpush1.bf16.msra.mxu0 0
        %581 = vmatprep.subr.bf16.mxu0 0
        %582 = vmatpush1.bf16.msra.mxu0 0
        %583 = vmatprep.subr.bf16.mxu0 0
        %584 = vmatpush1.bf16.msra.mxu0 0
        %585 = vmatprep.subr.bf16.mxu0 0
        %586 = vmatpush1.bf16.msra.mxu0 0
        %587 = vmatprep.subr.bf16.mxu0 0
        %588 = vmatpush1.bf16.msra.mxu0 0
        %589 = vmatprep.mubr.bf16.mxu0 0
        %590 = vmatmul.mubr.bf16.gmra.mrb[0].mxu0 %v541
        %v591 = vpop.f32.mrb[0].mxu0
        %v592 = vadd.f32 %v432, %v591
        %v593 = vpop.f32.mrb[0].mxu0
        %v594 = vadd.f32 %v432, %v593
        %v595 = vpop.f32.mrb[0].mxu0
        %v596 = vadd.f32 %v437, %v595
        %v597 = vpop.f32.mrb[0].mxu0
        %v598 = vadd.f32 %v437, %v597
        %599 = vmatprep.mubr.bf16.mxu0 0
        %600 = vmatmul.mubr.bf16.gmra.mrb[0].mxu0 %v542
        %v601 = vpop.f32.mrb[0].mxu0
        %v602 = vadd.f32 %v442, %v601
        %v603 = vpop.f32.mrb[0].mxu0
        %v604 = vadd.f32 %v442, %v603
        %v605 = vpop.f32.mrb[0].mxu0
        %v606 = vadd.f32 %v447, %v605
        %v607 = vpop.f32.mrb[0].mxu0
        %v608 = vadd.f32 %v447, %v607
        %609 = vmatprep.mubr.bf16.mxu0 0
        %610 = vmatmul.mubr.bf16.gmra.mrb[0].mxu0 %v543
        %v611 = vpop.f32.mrb[0].mxu0
        %v612 = vadd.f32 %v452, %v611
        %v613 = vpop.f32.mrb[0].mxu0
        %v614 = vadd.f32 %v452, %v613
        %v615 = vpop.f32.mrb[0].mxu0
        %v616 = vadd.f32 %v457, %v615
        %v617 = vpop.f32.mrb[0].mxu0
        %v618 = vadd.f32 %v457, %v617
        %619 = vmatprep.mubr.bf16.mxu0 0
        %620 = vmatmul.mubr.bf16.gmra.mrb[0].mxu0 %v544
        %v621 = vpop.f32.mrb[0].mxu0
        %v622 = vadd.f32 %v462, %v621
        %v623 = vpop.f32.mrb[0].mxu0
        %v624 = vadd.f32 %v462, %v623
        %v625 = vpop.f32.mrb[0].mxu0
        %v626 = vadd.f32 %v467, %v625
        %v627 = vpop.f32.mrb[0].mxu0
        %v628 = vadd.f32 %v467, %v627
        %629 = vmatprep.mubr.bf16.mxu0 0
        %630 = vmatmul.mubr.bf16.gmra.mrb[0].mxu0 %v545
        %v631 = vpop.f32.mrb[0].mxu0
        %v632 = vadd.f32 %v472, %v631
        %v633 = vpop.f32.mrb[0].mxu0
        %v634 = vadd.f32 %v472, %v633
        %v635 = vpop.f32.mrb[0].mxu0
        %v636 = vadd.f32 %v477, %v635
        %v637 = vpop.f32.mrb[0].mxu0
        %v638 = vadd.f32 %v477, %v637
        %639 = vmatprep.mubr.bf16.mxu0 0
        %640 = vmatmul.mubr.bf16.gmra.mrb[0].mxu0 %v546
        %v641 = vpop.f32.mrb[0].mxu0
        %v642 = vadd.f32 %v482, %v641
        %v643 = vpop.f32.mrb[0].mxu0
        %v644 = vadd.f32 %v482, %v643
        %v645 = vpop.f32.mrb[0].mxu0
        %v646 = vadd.f32 %v487, %v645
        %v647 = vpop.f32.mrb[0].mxu0
        %v648 = vadd.f32 %v487, %v647
        %649 = vmatprep.mubr.bf16.mxu0 0
        %650 = vmatmul.mubr.bf16.gmra.mrb[0].mxu0 %v547
        %v651 = vpop.f32.mrb[0].mxu0
        %v652 = vadd.f32 %v492, %v651
        %v653 = vpop.f32.mrb[0].mxu0
        %v654 = vadd.f32 %v492, %v653
        %v655 = vpop.f32.mrb[0].mxu0
        %v656 = vadd.f32 %v497, %v655
        %v657 = vpop.f32.mrb[0].mxu0
        %v658 = vadd.f32 %v497, %v657
        %659 = vmatprep.mubr.bf16.mxu0 0
        %660 = vmatmul.mubr.bf16.gmra.mrb[0].mxu0 %v548
        %v661 = vpop.f32.mrb[0].mxu0
        %v662 = vadd.f32 %v502, %v661
        %v663 = vpop.f32.mrb[0].mxu0
        %v664 = vadd.f32 %v502, %v663
        %v665 = vpop.f32.mrb[0].mxu0
        %v666 = vadd.f32 %v507, %v665
        %v667 = vpop.f32.mrb[0].mxu0
        %v668 = vadd.f32 %v507, %v667
        %669 = vdwg.mxu0
        %670 = vmatprep.subr.bf16.mxu0 %v368
        %671 = vmatpush1.bf16.msra.mxu0 %v367
        %672 = vmatprep.subr.bf16.mxu0 %v372
        %673 = vmatpush1.bf16.msra.mxu0 %v371
        %674 = vmatprep.subr.bf16.mxu0 %v376
        %675 = vmatpush1.bf16.msra.mxu0 %v375
        %676 = vmatprep.subr.bf16.mxu0 %v380
        %677 = vmatpush1.bf16.msra.mxu0 %v379
        %678 = vmatprep.subr.bf16.mxu0 %v384
        %679 = vmatpush1.bf16.msra.mxu0 %v383
        %680 = vmatprep.subr.bf16.mxu0 %v388
        %681 = vmatpush1.bf16.msra.mxu0 %v387
        %682 = vmatprep.subr.bf16.mxu0 %v392
        %683 = vmatpush1.bf16.msra.mxu0 %v391
        %684 = vmatprep.subr.bf16.mxu0 %v396
        %685 = vmatpush1.bf16.msra.mxu0 %v395
        %686 = vmatprep.subr.bf16.mxu0 0
        %687 = vmatpush1.bf16.msra.mxu0 0
        %688 = vmatprep.subr.bf16.mxu0 0
        %689 = vmatpush1.bf16.msra.mxu0 0
        %690 = vmatprep.subr.bf16.mxu0 0
        %691 = vmatpush1.bf16.msra.mxu0 0
        %692 = vmatprep.subr.bf16.mxu0 0
        %693 = vmatpush1.bf16.msra.mxu0 0
        %694 = vmatprep.subr.bf16.mxu0 0
        %695 = vmatpush1.bf16.msra.mxu0 0
        %696 = vmatprep.subr.bf16.mxu0 0
        %697 = vmatpush1.bf16.msra.mxu0 0
        %698 = vmatprep.subr.bf16.mxu0 0
        %699 = vmatpush1.bf16.msra.mxu0 0
        %700 = vmatprep.subr.bf16.mxu0 0
        %701 = vmatpush1.bf16.msra.mxu0 0
        %702 = vmatprep.mubr.bf16.mxu0 0
        %703 = vmatmul.mubr.bf16.gmra.mrb[0].mxu0 %v541
        %v704 = vpop.f32.mrb[0].mxu0
        %v705 = vadd.f32 %v432, %v704
        %v706 = vpop.f32.mrb[0].mxu0
        %v707 = vadd.f32 %v432, %v706
        %v708 = vpop.f32.mrb[0].mxu0
        %v709 = vadd.f32 %v437, %v708
        %v710 = vpop.f32.mrb[0].mxu0
        %v711 = vadd.f32 %v437, %v710
        %712 = vmatprep.mubr.bf16.mxu0 0
        %713 = vmatmul.mubr.bf16.gmra.mrb[0].mxu0 %v542
        %v714 = vpop.f32.mrb[0].mxu0
        %v715 = vadd.f32 %v442, %v714
        %v716 = vpop.f32.mrb[0].mxu0
        %v717 = vadd.f32 %v442, %v716
        %v718 = vpop.f32.mrb[0].mxu0
        %v719 = vadd.f32 %v447, %v718
        %v720 = vpop.f32.mrb[0].mxu0
        %v721 = vadd.f32 %v447, %v720
        %722 = vmatprep.mubr.bf16.mxu0 0
        %723 = vmatmul.mubr.bf16.gmra.mrb[0].mxu0 %v543
        %v724 = vpop.f32.mrb[0].mxu0
        %v725 = vadd.f32 %v452, %v724
        %v726 = vpop.f32.mrb[0].mxu0
        %v727 = vadd.f32 %v452, %v726
        %v728 = vpop.f32.mrb[0].mxu0
        %v729 = vadd.f32 %v457, %v728
        %v730 = vpop.f32.mrb[0].mxu0
        %v731 = vadd.f32 %v457, %v730
        %732 = vmatprep.mubr.bf16.mxu0 0
        %733 = vmatmul.mubr.bf16.gmra.mrb[0].mxu0 %v544
        %v734 = vpop.f32.mrb[0].mxu0
        %v735 = vadd.f32 %v462, %v734
        %v736 = vpop.f32.mrb[0].mxu0
        %v737 = vadd.f32 %v462, %v736
        %v738 = vpop.f32.mrb[0].mxu0
        %v739 = vadd.f32 %v467, %v738
        %v740 = vpop.f32.mrb[0].mxu0
        %v741 = vadd.f32 %v467, %v740
        %742 = vmatprep.mubr.bf16.mxu0 0
        %743 = vmatmul.mubr.bf16.gmra.mrb[0].mxu0 %v545
        %v744 = vpop.f32.mrb[0].mxu0
        %v745 = vadd.f32 %v472, %v744
        %v746 = vpop.f32.mrb[0].mxu0
        %v747 = vadd.f32 %v472, %v746
        %v748 = vpop.f32.mrb[0].mxu0
        %v749 = vadd.f32 %v477, %v748
        %v750 = vpop.f32.mrb[0].mxu0
        %v751 = vadd.f32 %v477, %v750
        %752 = vmatprep.mubr.bf16.mxu0 0
        %753 = vmatmul.mubr.bf16.gmra.mrb[0].mxu0 %v546
        %v754 = vpop.f32.mrb[0].mxu0
        %v755 = vadd.f32 %v482, %v754
        %v756 = vpop.f32.mrb[0].mxu0
        %v757 = vadd.f32 %v482, %v756
        %v758 = vpop.f32.mrb[0].mxu0
        %v759 = vadd.f32 %v487, %v758
        %v760 = vpop.f32.mrb[0].mxu0
        %v761 = vadd.f32 %v487, %v760
        %762 = vmatprep.mubr.bf16.mxu0 0
        %763 = vmatmul.mubr.bf16.gmra.mrb[0].mxu0 %v547
        %v764 = vpop.f32.mrb[0].mxu0
        %v765 = vadd.f32 %v492, %v764
        %v766 = vpop.f32.mrb[0].mxu0
        %v767 = vadd.f32 %v492, %v766
        %v768 = vpop.f32.mrb[0].mxu0
        %v769 = vadd.f32 %v497, %v768
        %v770 = vpop.f32.mrb[0].mxu0
        %v771 = vadd.f32 %v497, %v770
        %772 = vmatprep.mubr.bf16.mxu0 0
        %773 = vmatmul.mubr.bf16.gmra.mrb[0].mxu0 %v548
        %v774 = vpop.f32.mrb[0].mxu0
        %v775 = vadd.f32 %v502, %v774
        %v776 = vpop.f32.mrb[0].mxu0
        %v777 = vadd.f32 %v502, %v776
        %v778 = vpop.f32.mrb[0].mxu0
        %v779 = vadd.f32 %v507, %v778
        %v780 = vpop.f32.mrb[0].mxu0
        %v781 = vadd.f32 %v507, %v780
        %782 = vdwg.mxu0
        %vm783 = vcmp.gt.f32.partialorder %v592, 0.0
        %vm784 = vcmp.gt.f32.partialorder %v594, 0.0
        %vm785 = vcmp.gt.f32.partialorder %v705, 0.0
        %vm786 = vcmp.gt.f32.partialorder %v707, 0.0
        %vm787 = vcmp.gt.f32.partialorder %v596, 0.0
        %vm788 = vcmp.gt.f32.partialorder %v598, 0.0
        %vm789 = vcmp.gt.f32.partialorder %v709, 0.0
        %vm790 = vcmp.gt.f32.partialorder %v711, 0.0
        %vm791 = vcmp.gt.f32.partialorder %v602, 0.0
        %vm792 = vcmp.gt.f32.partialorder %v604, 0.0
        %vm793 = vcmp.gt.f32.partialorder %v715, 0.0
        %vm794 = vcmp.gt.f32.partialorder %v717, 0.0
        %vm795 = vcmp.gt.f32.partialorder %v606, 0.0
        %vm796 = vcmp.gt.f32.partialorder %v608, 0.0
        %vm797 = vcmp.gt.f32.partialorder %v719, 0.0
        %vm798 = vcmp.gt.f32.partialorder %v721, 0.0
        %vm799 = vcmp.gt.f32.partialorder %v612, 0.0
        %vm800 = vcmp.gt.f32.partialorder %v614, 0.0
        %vm801 = vcmp.gt.f32.partialorder %v725, 0.0
        %vm802 = vcmp.gt.f32.partialorder %v727, 0.0
        %vm803 = vcmp.gt.f32.partialorder %v616, 0.0
        %vm804 = vcmp.gt.f32.partialorder %v618, 0.0
        %vm805 = vcmp.gt.f32.partialorder %v729, 0.0
        %vm806 = vcmp.gt.f32.partialorder %v731, 0.0
        %vm807 = vcmp.gt.f32.partialorder %v622, 0.0
        %vm808 = vcmp.gt.f32.partialorder %v624, 0.0
        %vm809 = vcmp.gt.f32.partialorder %v735, 0.0
        %vm810 = vcmp.gt.f32.partialorder %v737, 0.0
        %vm811 = vcmp.gt.f32.partialorder %v626, 0.0
        %vm812 = vcmp.gt.f32.partialorder %v628, 0.0
        %vm813 = vcmp.gt.f32.partialorder %v739, 0.0
        %vm814 = vcmp.gt.f32.partialorder %v741, 0.0
        %vm815 = vcmp.gt.f32.partialorder %v632, 0.0
        %vm816 = vcmp.gt.f32.partialorder %v634, 0.0
        %vm817 = vcmp.gt.f32.partialorder %v745, 0.0
        %vm818 = vcmp.gt.f32.partialorder %v747, 0.0
        %vm819 = vcmp.gt.f32.partialorder %v636, 0.0
        %vm820 = vcmp.gt.f32.partialorder %v638, 0.0
        %vm821 = vcmp.gt.f32.partialorder %v749, 0.0
        %vm822 = vcmp.gt.f32.partialorder %v751, 0.0
        %vm823 = vcmp.gt.f32.partialorder %v642, 0.0
        %vm824 = vcmp.gt.f32.partialorder %v644, 0.0
        %vm825 = vcmp.gt.f32.partialorder %v755, 0.0
        %vm826 = vcmp.gt.f32.partialorder %v757, 0.0
        %vm827 = vcmp.gt.f32.partialorder %v646, 0.0
        %vm828 = vcmp.gt.f32.partialorder %v648, 0.0
        %vm829 = vcmp.gt.f32.partialorder %v759, 0.0
        %vm830 = vcmp.gt.f32.partialorder %v761, 0.0
        %vm831 = vcmp.gt.f32.partialorder %v652, 0.0
        %vm832 = vcmp.gt.f32.partialorder %v654, 0.0
        %vm833 = vcmp.gt.f32.partialorder %v765, 0.0
        %vm834 = vcmp.gt.f32.partialorder %v767, 0.0
        %vm835 = vcmp.gt.f32.partialorder %v656, 0.0
        %vm836 = vcmp.gt.f32.partialorder %v658, 0.0
        %vm837 = vcmp.gt.f32.partialorder %v769, 0.0
        %vm838 = vcmp.gt.f32.partialorder %v771, 0.0
        %vm839 = vcmp.gt.f32.partialorder %v662, 0.0
        %vm840 = vcmp.gt.f32.partialorder %v664, 0.0
        %vm841 = vcmp.gt.f32.partialorder %v775, 0.0
        %vm842 = vcmp.gt.f32.partialorder %v777, 0.0
        %vm843 = vcmp.gt.f32.partialorder %v666, 0.0
        %vm844 = vcmp.gt.f32.partialorder %v668, 0.0
        %vm845 = vcmp.gt.f32.partialorder %v779, 0.0
        %vm846 = vcmp.gt.f32.partialorder %v781, 0.0
        %v847 = vmul.f32 %v592, 0.2
        %v848 = vmul.f32 %v594, 0.2
        %v849 = vmul.f32 %v705, 0.2
        %v850 = vmul.f32 %v707, 0.2
        %v851 = vmul.f32 %v596, 0.2
        %v852 = vmul.f32 %v598, 0.2
        %v853 = vmul.f32 %v709, 0.2
        %v854 = vmul.f32 %v711, 0.2
        %v855 = vmul.f32 %v602, 0.2
        %v856 = vmul.f32 %v604, 0.2
        %v857 = vmul.f32 %v715, 0.2
        %v858 = vmul.f32 %v717, 0.2
        %v859 = vmul.f32 %v606, 0.2
        %v860 = vmul.f32 %v608, 0.2
        %v861 = vmul.f32 %v719, 0.2
        %v862 = vmul.f32 %v721, 0.2
        %v863 = vmul.f32 %v612, 0.2
        %v864 = vmul.f32 %v614, 0.2
        %v865 = vmul.f32 %v725, 0.2
        %v866 = vmul.f32 %v727, 0.2
        %v867 = vmul.f32 %v616, 0.2
        %v868 = vmul.f32 %v618, 0.2
        %v869 = vmul.f32 %v729, 0.2
        %v870 = vmul.f32 %v731, 0.2
        %v871 = vmul.f32 %v622, 0.2
        %v872 = vmul.f32 %v624, 0.2
        %v873 = vmul.f32 %v735, 0.2
        %v874 = vmul.f32 %v737, 0.2
        %v875 = vmul.f32 %v626, 0.2
        %v876 = vmul.f32 %v628, 0.2
        %v877 = vmul.f32 %v739, 0.2
        %v878 = vmul.f32 %v741, 0.2
        %v879 = vmul.f32 %v632, 0.2
        %v880 = vmul.f32 %v634, 0.2
        %v881 = vmul.f32 %v745, 0.2
        %v882 = vmul.f32 %v747, 0.2
        %v883 = vmul.f32 %v636, 0.2
        %v884 = vmul.f32 %v638, 0.2
        %v885 = vmul.f32 %v749, 0.2
        %v886 = vmul.f32 %v751, 0.2
        %v887 = vmul.f32 %v642, 0.2
        %v888 = vmul.f32 %v644, 0.2
        %v889 = vmul.f32 %v755, 0.2
        %v890 = vmul.f32 %v757, 0.2
        %v891 = vmul.f32 %v646, 0.2
        %v892 = vmul.f32 %v648, 0.2
        %v893 = vmul.f32 %v759, 0.2
        %v894 = vmul.f32 %v761, 0.2
        %v895 = vmul.f32 %v652, 0.2
        %v896 = vmul.f32 %v654, 0.2
        %v897 = vmul.f32 %v765, 0.2
        %v898 = vmul.f32 %v767, 0.2
        %v899 = vmul.f32 %v656, 0.2
        %v900 = vmul.f32 %v658, 0.2
        %v901 = vmul.f32 %v769, 0.2
        %v902 = vmul.f32 %v771, 0.2
        %v903 = vmul.f32 %v662, 0.2
        %v904 = vmul.f32 %v664, 0.2
        %v905 = vmul.f32 %v775, 0.2
        %v906 = vmul.f32 %v777, 0.2
        %v907 = vmul.f32 %v666, 0.2
        %v908 = vmul.f32 %v668, 0.2
        %v909 = vmul.f32 %v779, 0.2
        %v910 = vmul.f32 %v781, 0.2
        %v911 = vsel %vm783, %v592, %v847
        %v912 = vsel %vm784, %v594, %v848
        %v913 = vsel %vm785, %v705, %v849
        %v914 = vsel %vm786, %v707, %v850
        %v915 = vsel %vm787, %v596, %v851
        %v916 = vsel %vm788, %v598, %v852
        %v917 = vsel %vm789, %v709, %v853
        %v918 = vsel %vm790, %v711, %v854
        %v919 = vsel %vm791, %v602, %v855
        %v920 = vsel %vm792, %v604, %v856
        %v921 = vsel %vm793, %v715, %v857
        %v922 = vsel %vm794, %v717, %v858
        %v923 = vsel %vm795, %v606, %v859
        %v924 = vsel %vm796, %v608, %v860
        %v925 = vsel %vm797, %v719, %v861
        %v926 = vsel %vm798, %v721, %v862
        %v927 = vsel %vm799, %v612, %v863
        %v928 = vsel %vm800, %v614, %v864
        %v929 = vsel %vm801, %v725, %v865
        %v930 = vsel %vm802, %v727, %v866
        %v931 = vsel %vm803, %v616, %v867
        %v932 = vsel %vm804, %v618, %v868
        %v933 = vsel %vm805, %v729, %v869
        %v934 = vsel %vm806, %v731, %v870
        %v935 = vsel %vm807, %v622, %v871
        %v936 = vsel %vm808, %v624, %v872
        %v937 = vsel %vm809, %v735, %v873
        %v938 = vsel %vm810, %v737, %v874
        %v939 = vsel %vm811, %v626, %v875
        %v940 = vsel %vm812, %v628, %v876
        %v941 = vsel %vm813, %v739, %v877
        %v942 = vsel %vm814, %v741, %v878
        %v943 = vsel %vm815, %v632, %v879
        %v944 = vsel %vm816, %v634, %v880
        %v945 = vsel %vm817, %v745, %v881
        %v946 = vsel %vm818, %v747, %v882
        %v947 = vsel %vm819, %v636, %v883
        %v948 = vsel %vm820, %v638, %v884
        %v949 = vsel %vm821, %v749, %v885
        %v950 = vsel %vm822, %v751, %v886
        %v951 = vsel %vm823, %v642, %v887
        %v952 = vsel %vm824, %v644, %v888
        %v953 = vsel %vm825, %v755, %v889
        %v954 = vsel %vm826, %v757, %v890
        %v955 = vsel %vm827, %v646, %v891
        %v956 = vsel %vm828, %v648, %v892
        %v957 = vsel %vm829, %v759, %v893
        %v958 = vsel %vm830, %v761, %v894
        %v959 = vsel %vm831, %v652, %v895
        %v960 = vsel %vm832, %v654, %v896
        %v961 = vsel %vm833, %v765, %v897
        %v962 = vsel %vm834, %v767, %v898
        %v963 = vsel %vm835, %v656, %v899
        %v964 = vsel %vm836, %v658, %v900
        %v965 = vsel %vm837, %v769, %v901
        %v966 = vsel %vm838, %v771, %v902
        %v967 = vsel %vm839, %v662, %v903
        %v968 = vsel %vm840, %v664, %v904
        %v969 = vsel %vm841, %v775, %v905
        %v970 = vsel %vm842, %v777, %v906
        %v971 = vsel %vm843, %v666, %v907
        %v972 = vsel %vm844, %v668, %v908
        %v973 = vsel %vm845, %v779, %v909
        %v974 = vsel %vm846, %v781, %v910
        %v975 = vld [vmem:[%s3] sm:$0xf]
        %v976 = vld [vmem:[%s3 + $0x4] sm:$0xf]
        %v977 = vld [vmem:[%s3 + $0x8] sm:$0xf]
        %v978 = vld [vmem:[%s3 + $0xc] sm:$0xf]
        %v979 = vld [vmem:[%s3 + $0x10] sm:$0xf]
        %v980 = vld [vmem:[%s3 + $0x14] sm:$0xf]
        %v981 = vld [vmem:[%s3 + $0x18] sm:$0xf]
        %v982 = vld [vmem:[%s3 + $0x1c] sm:$0xf]
        %v983 = vld [vmem:[%s3 + $0x20] sm:$0xf]
        %v984 = vld [vmem:[%s3 + $0x24] sm:$0xf]
        %v985 = vld [vmem:[%s3 + $0x28] sm:$0xf]
        %v986 = vld [vmem:[%s3 + $0x2c] sm:$0xf]
        %v987 = vld [vmem:[%s3 + $0x30] sm:$0xf]
        %v988 = vld [vmem:[%s3 + $0x34] sm:$0xf]
        %v989 = vld [vmem:[%s3 + $0x38] sm:$0xf]
        %v990 = vld [vmem:[%s3 + $0x3c] sm:$0xf]
        %v991 = vpack.c.bf16 %v915, %v911
        %v992 = vpack.c.bf16 %v916, %v912
        %v993 = vpack.c.bf16 %v917, %v913
        %v994 = vpack.c.bf16 %v918, %v914
        %v995 = vpack.c.bf16 %v923, %v919
        %v996 = vpack.c.bf16 %v924, %v920
        %v997 = vpack.c.bf16 %v925, %v921
        %v998 = vpack.c.bf16 %v926, %v922
        %v999 = vpack.c.bf16 %v931, %v927
        %v1000 = vpack.c.bf16 %v932, %v928
        %v1001 = vpack.c.bf16 %v933, %v929
        %v1002 = vpack.c.bf16 %v934, %v930
        %v1003 = vpack.c.bf16 %v939, %v935
        %v1004 = vpack.c.bf16 %v940, %v936
        %v1005 = vpack.c.bf16 %v941, %v937
        %v1006 = vpack.c.bf16 %v942, %v938
        %v1007 = vpack.c.bf16 %v947, %v943
        %v1008 = vpack.c.bf16 %v948, %v944
        %v1009 = vpack.c.bf16 %v949, %v945
        %v1010 = vpack.c.bf16 %v950, %v946
        %v1011 = vpack.c.bf16 %v955, %v951
        %v1012 = vpack.c.bf16 %v956, %v952
        %v1013 = vpack.c.bf16 %v957, %v953
        %v1014 = vpack.c.bf16 %v958, %v954
        %v1015 = vpack.c.bf16 %v963, %v959
        %v1016 = vpack.c.bf16 %v964, %v960
        %v1017 = vpack.c.bf16 %v965, %v961
        %v1018 = vpack.c.bf16 %v966, %v962
        %v1019 = vpack.c.bf16 %v971, %v967
        %v1020 = vpack.c.bf16 %v972, %v968
        %v1021 = vpack.c.bf16 %v973, %v969
        %v1022 = vpack.c.bf16 %v974, %v970
        %v1023 = vld [vmem:[%s4] sm:$0xff]
        %v1024 = vld [vmem:[%s4 + $0x8] sm:$0xff]
        %v1025 = vld [vmem:[%s4 + $0x10] sm:$0xff]
        %v1026 = vld [vmem:[%s4 + $0x18] sm:$0xff]
        %v1027 = vld [vmem:[%s4 + $0x20] sm:$0xff]
        %v1028 = vld [vmem:[%s4 + $0x28] sm:$0xff]
        %v1029 = vld [vmem:[%s4 + $0x30] sm:$0xff]
        %v1030 = vld [vmem:[%s4 + $0x38] sm:$0xff]
        %v1031 = vld [vmem:[%s4 + $0x40] sm:$0xff]
        %v1032 = vld [vmem:[%s4 + $0x48] sm:$0xff]
        %v1033 = vld [vmem:[%s4 + $0x50] sm:$0xff]
        %v1034 = vld [vmem:[%s4 + $0x58] sm:$0xff]
        %v1035 = vld [vmem:[%s4 + $0x60] sm:$0xff]
        %v1036 = vld [vmem:[%s4 + $0x68] sm:$0xff]
        %v1037 = vld [vmem:[%s4 + $0x70] sm:$0xff]
        %v1038 = vld [vmem:[%s4 + $0x78] sm:$0xff]
        %1040 = vset.pattern.permute.xlu0 0
        %1041 = vperm.xlu0 %1040, %v1023
        %v1042 = vpop.permute.xlu0 %1041
        %1045 = vset.pattern.permute.xlu0 0
        %1046 = vperm.xlu0 %1045, %v1024
        %v1047 = vpop.permute.xlu0 %1046
        %1050 = vset.pattern.permute.xlu0 0
        %1051 = vperm.xlu0 %1050, %v1025
        %v1052 = vpop.permute.xlu0 %1051
        %1055 = vset.pattern.permute.xlu0 0
        %1056 = vperm.xlu0 %1055, %v1026
        %v1057 = vpop.permute.xlu0 %1056
        %1060 = vset.pattern.permute.xlu0 0
        %1061 = vperm.xlu0 %1060, %v1027
        %v1062 = vpop.permute.xlu0 %1061
        %1065 = vset.pattern.permute.xlu0 0
        %1066 = vperm.xlu0 %1065, %v1028
        %v1067 = vpop.permute.xlu0 %1066
        %1070 = vset.pattern.permute.xlu0 0
        %1071 = vperm.xlu0 %1070, %v1029
        %v1072 = vpop.permute.xlu0 %1071
        %1075 = vset.pattern.permute.xlu0 0
        %1076 = vperm.xlu0 %1075, %v1030
        %v1077 = vpop.permute.xlu0 %1076
        %1080 = vset.pattern.permute.xlu0 0
        %1081 = vperm.xlu0 %1080, %v1031
        %v1082 = vpop.permute.xlu0 %1081
        %1085 = vset.pattern.permute.xlu0 0
        %1086 = vperm.xlu0 %1085, %v1032
        %v1087 = vpop.permute.xlu0 %1086
        %1090 = vset.pattern.permute.xlu0 0
        %1091 = vperm.xlu0 %1090, %v1033
        %v1092 = vpop.permute.xlu0 %1091
        %1095 = vset.pattern.permute.xlu0 0
        %1096 = vperm.xlu0 %1095, %v1034
        %v1097 = vpop.permute.xlu0 %1096
        %1100 = vset.pattern.permute.xlu0 0
        %1101 = vperm.xlu0 %1100, %v1035
        %v1102 = vpop.permute.xlu0 %1101
        %1105 = vset.pattern.permute.xlu0 0
        %1106 = vperm.xlu0 %1105, %v1036
        %v1107 = vpop.permute.xlu0 %1106
        %1110 = vset.pattern.permute.xlu0 0
        %1111 = vperm.xlu0 %1110, %v1037
        %v1112 = vpop.permute.xlu0 %1111
        %1115 = vset.pattern.permute.xlu0 0
        %1116 = vperm.xlu0 %1115, %v1038
        %v1117 = vpop.permute.xlu0 %1116
        %v1135 = vunpack.c.l.b16 %v975
        %v1136 = vunpack.c.l.b16 %v976
        %v1137 = vunpack.c.l.b16 %v977
        %v1138 = vunpack.c.l.b16 %v978
        %v1139 = vunpack.c.l.b16 %v979
        %v1140 = vunpack.c.l.b16 %v980
        %v1141 = vunpack.c.l.b16 %v981
        %v1142 = vunpack.c.l.b16 %v982
        %v1143 = vunpack.c.l.b16 %v983
        %v1144 = vunpack.c.l.b16 %v984
        %v1145 = vunpack.c.l.b16 %v985
        %v1146 = vunpack.c.l.b16 %v986
        %v1147 = vunpack.c.l.b16 %v987
        %v1148 = vunpack.c.l.b16 %v988
        %v1149 = vunpack.c.l.b16 %v989
        %v1150 = vunpack.c.l.b16 %v990
        %v1151 = vpack.c.b16 %v1136, %v1135
        %v1152 = vpack.c.b16 %v1138, %v1137
        %v1153 = vpack.c.b16 %v1140, %v1139
        %v1154 = vpack.c.b16 %v1142, %v1141
        %v1155 = vpack.c.b16 %v1144, %v1143
        %v1156 = vpack.c.b16 %v1146, %v1145
        %v1157 = vpack.c.b16 %v1148, %v1147
        %v1158 = vpack.c.b16 %v1150, %v1149
        %1167 = vmatprep.subr.bf16.mxu0 %v992
        %1168 = vmatpush1.bf16.msra.mxu0 %v991
        %1169 = vmatprep.subr.bf16.mxu0 %v996
        %1170 = vmatpush1.bf16.msra.mxu0 %v995
        %1171 = vmatprep.subr.bf16.mxu0 %v1000
        %1172 = vmatpush1.bf16.msra.mxu0 %v999
        %1173 = vmatprep.subr.bf16.mxu0 %v1004
        %1174 = vmatpush1.bf16.msra.mxu0 %v1003
        %1175 = vmatprep.subr.bf16.mxu0 %v1008
        %1176 = vmatpush1.bf16.msra.mxu0 %v1007
        %1177 = vmatprep.subr.bf16.mxu0 %v1012
        %1178 = vmatpush1.bf16.msra.mxu0 %v1011
        %1179 = vmatprep.subr.bf16.mxu0 %v1016
        %1180 = vmatpush1.bf16.msra.mxu0 %v1015
        %1181 = vmatprep.subr.bf16.mxu0 %v1020
        %1182 = vmatpush1.bf16.msra.mxu0 %v1019
        %1183 = vmatprep.subr.bf16.mxu0 0
        %1184 = vmatpush1.bf16.msra.mxu0 0
        %1185 = vmatprep.subr.bf16.mxu0 0
        %1186 = vmatpush1.bf16.msra.mxu0 0
        %1187 = vmatprep.subr.bf16.mxu0 0
        %1188 = vmatpush1.bf16.msra.mxu0 0
        %1189 = vmatprep.subr.bf16.mxu0 0
        %1190 = vmatpush1.bf16.msra.mxu0 0
        %1191 = vmatprep.subr.bf16.mxu0 0
        %1192 = vmatpush1.bf16.msra.mxu0 0
        %1193 = vmatprep.subr.bf16.mxu0 0
        %1194 = vmatpush1.bf16.msra.mxu0 0
        %1195 = vmatprep.subr.bf16.mxu0 0
        %1196 = vmatpush1.bf16.msra.mxu0 0
        %1197 = vmatprep.subr.bf16.mxu0 0
        %1198 = vmatpush1.bf16.msra.mxu0 0
        %1199 = vmatprep.mubr.bf16.mxu0 0
        %1200 = vmatmul.mubr.bf16.gmra.mrb[0].mxu0 %v1151
        %v1201 = vpop.f32.mrb[0].mxu0
        %v1202 = vadd.f32 %v1042, %v1201
        %v1203 = vpop.f32.mrb[0].mxu0
        %v1204 = vadd.f32 %v1042, %v1203
        %v1205 = vpop.f32.mrb[0].mxu0
        %v1206 = vadd.f32 %v1047, %v1205
        %v1207 = vpop.f32.mrb[0].mxu0
        %v1208 = vadd.f32 %v1047, %v1207
        %1209 = vmatprep.mubr.bf16.mxu0 0
        %1210 = vmatmul.mubr.bf16.gmra.mrb[0].mxu0 %v1152
        %v1211 = vpop.f32.mrb[0].mxu0
        %v1212 = vadd.f32 %v1052, %v1211
        %v1213 = vpop.f32.mrb[0].mxu0
        %v1214 = vadd.f32 %v1052, %v1213
        %v1215 = vpop.f32.mrb[0].mxu0
        %v1216 = vadd.f32 %v1057, %v1215
        %v1217 = vpop.f32.mrb[0].mxu0
        %v1218 = vadd.f32 %v1057, %v1217
        %1219 = vmatprep.mubr.bf16.mxu0 0
        %1220 = vmatmul.mubr.bf16.gmra.mrb[0].mxu0 %v1153
        %v1221 = vpop.f32.mrb[0].mxu0
        %v1222 = vadd.f32 %v1062, %v1221
        %v1223 = vpop.f32.mrb[0].mxu0
        %v1224 = vadd.f32 %v1062, %v1223
        %v1225 = vpop.f32.mrb[0].mxu0
        %v1226 = vadd.f32 %v1067, %v1225
        %v1227 = vpop.f32.mrb[0].mxu0
        %v1228 = vadd.f32 %v1067, %v1227
        %1229 = vmatprep.mubr.bf16.mxu0 0
        %1230 = vmatmul.mubr.bf16.gmra.mrb[0].mxu0 %v1154
        %v1231 = vpop.f32.mrb[0].mxu0
        %v1232 = vadd.f32 %v1072, %v1231
        %v1233 = vpop.f32.mrb[0].mxu0
        %v1234 = vadd.f32 %v1072, %v1233
        %v1235 = vpop.f32.mrb[0].mxu0
        %v1236 = vadd.f32 %v1077, %v1235
        %v1237 = vpop.f32.mrb[0].mxu0
        %v1238 = vadd.f32 %v1077, %v1237
        %1239 = vmatprep.mubr.bf16.mxu0 0
        %1240 = vmatmul.mubr.bf16.gmra.mrb[0].mxu0 %v1155
        %v1241 = vpop.f32.mrb[0].mxu0
        %v1242 = vadd.f32 %v1082, %v1241
        %v1243 = vpop.f32.mrb[0].mxu0
        %v1244 = vadd.f32 %v1082, %v1243
        %v1245 = vpop.f32.mrb[0].mxu0
        %v1246 = vadd.f32 %v1087, %v1245
        %v1247 = vpop.f32.mrb[0].mxu0
        %v1248 = vadd.f32 %v1087, %v1247
        %1249 = vmatprep.mubr.bf16.mxu0 0
        %1250 = vmatmul.mubr.bf16.gmra.mrb[0].mxu0 %v1156
        %v1251 = vpop.f32.mrb[0].mxu0
        %v1252 = vadd.f32 %v1092, %v1251
        %v1253 = vpop.f32.mrb[0].mxu0
        %v1254 = vadd.f32 %v1092, %v1253
        %v1255 = vpop.f32.mrb[0].mxu0
        %v1256 = vadd.f32 %v1097, %v1255
        %v1257 = vpop.f32.mrb[0].mxu0
        %v1258 = vadd.f32 %v1097, %v1257
        %1259 = vmatprep.mubr.bf16.mxu0 0
        %1260 = vmatmul.mubr.bf16.gmra.mrb[0].mxu0 %v1157
        %v1261 = vpop.f32.mrb[0].mxu0
        %v1262 = vadd.f32 %v1102, %v1261
        %v1263 = vpop.f32.mrb[0].mxu0
        %v1264 = vadd.f32 %v1102, %v1263
        %v1265 = vpop.f32.mrb[0].mxu0
        %v1266 = vadd.f32 %v1107, %v1265
        %v1267 = vpop.f32.mrb[0].mxu0
        %v1268 = vadd.f32 %v1107, %v1267
        %1269 = vmatprep.mubr.bf16.mxu0 0
        %1270 = vmatmul.mubr.bf16.gmra.mrb[0].mxu0 %v1158
        %v1271 = vpop.f32.mrb[0].mxu0
        %v1272 = vadd.f32 %v1112, %v1271
        %v1273 = vpop.f32.mrb[0].mxu0
        %v1274 = vadd.f32 %v1112, %v1273
        %v1275 = vpop.f32.mrb[0].mxu0
        %v1276 = vadd.f32 %v1117, %v1275
        %v1277 = vpop.f32.mrb[0].mxu0
        %v1278 = vadd.f32 %v1117, %v1277
        %1279 = vdwg.mxu0
        %1280 = vmatprep.subr.bf16.mxu0 %v994
        %1281 = vmatpush1.bf16.msra.mxu0 %v993
        %1282 = vmatprep.subr.bf16.mxu0 %v998
        %1283 = vmatpush1.bf16.msra.mxu0 %v997
        %1284 = vmatprep.subr.bf16.mxu0 %v1002
        %1285 = vmatpush1.bf16.msra.mxu0 %v1001
        %1286 = vmatprep.subr.bf16.mxu0 %v1006
        %1287 = vmatpush1.bf16.msra.mxu0 %v1005
        %1288 = vmatprep.subr.bf16.mxu0 %v1010
        %1289 = vmatpush1.bf16.msra.mxu0 %v1009
        %1290 = vmatprep.subr.bf16.mxu0 %v1014
        %1291 = vmatpush1.bf16.msra.mxu0 %v1013
        %1292 = vmatprep.subr.bf16.mxu0 %v1018
        %1293 = vmatpush1.bf16.msra.mxu0 %v1017
        %1294 = vmatprep.subr.bf16.mxu0 %v1022
        %1295 = vmatpush1.bf16.msra.mxu0 %v1021
        %1296 = vmatprep.subr.bf16.mxu0 0
        %1297 = vmatpush1.bf16.msra.mxu0 0
        %1298 = vmatprep.subr.bf16.mxu0 0
        %1299 = vmatpush1.bf16.msra.mxu0 0
        %1300 = vmatprep.subr.bf16.mxu0 0
        %1301 = vmatpush1.bf16.msra.mxu0 0
        %1302 = vmatprep.subr.bf16.mxu0 0
        %1303 = vmatpush1.bf16.msra.mxu0 0
        %1304 = vmatprep.subr.bf16.mxu0 0
        %1305 = vmatpush1.bf16.msra.mxu0 0
        %1306 = vmatprep.subr.bf16.mxu0 0
        %1307 = vmatpush1.bf16.msra.mxu0 0
        %1308 = vmatprep.subr.bf16.mxu0 0
        %1309 = vmatpush1.bf16.msra.mxu0 0
        %1310 = vmatprep.subr.bf16.mxu0 0
        %1311 = vmatpush1.bf16.msra.mxu0 0
        %1312 = vmatprep.mubr.bf16.mxu0 0
        %1313 = vmatmul.mubr.bf16.gmra.mrb[0].mxu0 %v1151
        %v1314 = vpop.f32.mrb[0].mxu0
        %v1315 = vadd.f32 %v1042, %v1314
        %v1316 = vpop.f32.mrb[0].mxu0
        %v1317 = vadd.f32 %v1042, %v1316
        %v1318 = vpop.f32.mrb[0].mxu0
        %v1319 = vadd.f32 %v1047, %v1318
        %v1320 = vpop.f32.mrb[0].mxu0
        %v1321 = vadd.f32 %v1047, %v1320
        %1322 = vmatprep.mubr.bf16.mxu0 0
        %1323 = vmatmul.mubr.bf16.gmra.mrb[0].mxu0 %v1152
        %v1324 = vpop.f32.mrb[0].mxu0
        %v1325 = vadd.f32 %v1052, %v1324
        %v1326 = vpop.f32.mrb[0].mxu0
        %v1327 = vadd.f32 %v1052, %v1326
        %v1328 = vpop.f32.mrb[0].mxu0
        %v1329 = vadd.f32 %v1057, %v1328
        %v1330 = vpop.f32.mrb[0].mxu0
        %v1331 = vadd.f32 %v1057, %v1330
        %1332 = vmatprep.mubr.bf16.mxu0 0
        %1333 = vmatmul.mubr.bf16.gmra.mrb[0].mxu0 %v1153
        %v1334 = vpop.f32.mrb[0].mxu0
        %v1335 = vadd.f32 %v1062, %v1334
        %v1336 = vpop.f32.mrb[0].mxu0
        %v1337 = vadd.f32 %v1062, %v1336
        %v1338 = vpop.f32.mrb[0].mxu0
        %v1339 = vadd.f32 %v1067, %v1338
        %v1340 = vpop.f32.mrb[0].mxu0
        %v1341 = vadd.f32 %v1067, %v1340
        %1342 = vmatprep.mubr.bf16.mxu0 0
        %1343 = vmatmul.mubr.bf16.gmra.mrb[0].mxu0 %v1154
        %v1344 = vpop.f32.mrb[0].mxu0
        %v1345 = vadd.f32 %v1072, %v1344
        %v1346 = vpop.f32.mrb[0].mxu0
        %v1347 = vadd.f32 %v1072, %v1346
        %v1348 = vpop.f32.mrb[0].mxu0
        %v1349 = vadd.f32 %v1077, %v1348
        %v1350 = vpop.f32.mrb[0].mxu0
        %v1351 = vadd.f32 %v1077, %v1350
        %1352 = vmatprep.mubr.bf16.mxu0 0
        %1353 = vmatmul.mubr.bf16.gmra.mrb[0].mxu0 %v1155
        %v1354 = vpop.f32.mrb[0].mxu0
        %v1355 = vadd.f32 %v1082, %v1354
        %v1356 = vpop.f32.mrb[0].mxu0
        %v1357 = vadd.f32 %v1082, %v1356
        %v1358 = vpop.f32.mrb[0].mxu0
        %v1359 = vadd.f32 %v1087, %v1358
        %v1360 = vpop.f32.mrb[0].mxu0
        %v1361 = vadd.f32 %v1087, %v1360
        %1362 = vmatprep.mubr.bf16.mxu0 0
        %1363 = vmatmul.mubr.bf16.gmra.mrb[0].mxu0 %v1156
        %v1364 = vpop.f32.mrb[0].mxu0
        %v1365 = vadd.f32 %v1092, %v1364
        %v1366 = vpop.f32.mrb[0].mxu0
        %v1367 = vadd.f32 %v1092, %v1366
        %v1368 = vpop.f32.mrb[0].mxu0
        %v1369 = vadd.f32 %v1097, %v1368
        %v1370 = vpop.f32.mrb[0].mxu0
        %v1371 = vadd.f32 %v1097, %v1370
        %1372 = vmatprep.mubr.bf16.mxu0 0
        %1373 = vmatmul.mubr.bf16.gmra.mrb[0].mxu0 %v1157
        %v1374 = vpop.f32.mrb[0].mxu0
        %v1375 = vadd.f32 %v1102, %v1374
        %v1376 = vpop.f32.mrb[0].mxu0
        %v1377 = vadd.f32 %v1102, %v1376
        %v1378 = vpop.f32.mrb[0].mxu0
        %v1379 = vadd.f32 %v1107, %v1378
        %v1380 = vpop.f32.mrb[0].mxu0
        %v1381 = vadd.f32 %v1107, %v1380
        %1382 = vmatprep.mubr.bf16.mxu0 0
        %1383 = vmatmul.mubr.bf16.gmra.mrb[0].mxu0 %v1158
        %v1384 = vpop.f32.mrb[0].mxu0
        %v1385 = vadd.f32 %v1112, %v1384
        %v1386 = vpop.f32.mrb[0].mxu0
        %v1387 = vadd.f32 %v1112, %v1386
        %v1388 = vpop.f32.mrb[0].mxu0
        %v1389 = vadd.f32 %v1117, %v1388
        %v1390 = vpop.f32.mrb[0].mxu0
        %v1391 = vadd.f32 %v1117, %v1390
        %1392 = vdwg.mxu0
        %vm1393 = vcmp.gt.f32.partialorder %v1202, 0.0
        %vm1394 = vcmp.gt.f32.partialorder %v1204, 0.0
        %vm1395 = vcmp.gt.f32.partialorder %v1315, 0.0
        %vm1396 = vcmp.gt.f32.partialorder %v1317, 0.0
        %vm1397 = vcmp.gt.f32.partialorder %v1206, 0.0
        %vm1398 = vcmp.gt.f32.partialorder %v1208, 0.0
        %vm1399 = vcmp.gt.f32.partialorder %v1319, 0.0
        %vm1400 = vcmp.gt.f32.partialorder %v1321, 0.0
        %vm1401 = vcmp.gt.f32.partialorder %v1212, 0.0
        %vm1402 = vcmp.gt.f32.partialorder %v1214, 0.0
        %vm1403 = vcmp.gt.f32.partialorder %v1325, 0.0
        %vm1404 = vcmp.gt.f32.partialorder %v1327, 0.0
        %vm1405 = vcmp.gt.f32.partialorder %v1216, 0.0
        %vm1406 = vcmp.gt.f32.partialorder %v1218, 0.0
        %vm1407 = vcmp.gt.f32.partialorder %v1329, 0.0
        %vm1408 = vcmp.gt.f32.partialorder %v1331, 0.0
        %vm1409 = vcmp.gt.f32.partialorder %v1222, 0.0
        %vm1410 = vcmp.gt.f32.partialorder %v1224, 0.0
        %vm1411 = vcmp.gt.f32.partialorder %v1335, 0.0
        %vm1412 = vcmp.gt.f32.partialorder %v1337, 0.0
        %vm1413 = vcmp.gt.f32.partialorder %v1226, 0.0
        %vm1414 = vcmp.gt.f32.partialorder %v1228, 0.0
        %vm1415 = vcmp.gt.f32.partialorder %v1339, 0.0
        %vm1416 = vcmp.gt.f32.partialorder %v1341, 0.0
        %vm1417 = vcmp.gt.f32.partialorder %v1232, 0.0
        %vm1418 = vcmp.gt.f32.partialorder %v1234, 0.0
        %vm1419 = vcmp.gt.f32.partialorder %v1345, 0.0
        %vm1420 = vcmp.gt.f32.partialorder %v1347, 0.0
        %vm1421 = vcmp.gt.f32.partialorder %v1236, 0.0
        %vm1422 = vcmp.gt.f32.partialorder %v1238, 0.0
        %vm1423 = vcmp.gt.f32.partialorder %v1349, 0.0
        %vm1424 = vcmp.gt.f32.partialorder %v1351, 0.0
        %vm1425 = vcmp.gt.f32.partialorder %v1242, 0.0
        %vm1426 = vcmp.gt.f32.partialorder %v1244, 0.0
        %vm1427 = vcmp.gt.f32.partialorder %v1355, 0.0
        %vm1428 = vcmp.gt.f32.partialorder %v1357, 0.0
        %vm1429 = vcmp.gt.f32.partialorder %v1246, 0.0
        %vm1430 = vcmp.gt.f32.partialorder %v1248, 0.0
        %vm1431 = vcmp.gt.f32.partialorder %v1359, 0.0
        %vm1432 = vcmp.gt.f32.partialorder %v1361, 0.0
        %vm1433 = vcmp.gt.f32.partialorder %v1252, 0.0
        %vm1434 = vcmp.gt.f32.partialorder %v1254, 0.0
        %vm1435 = vcmp.gt.f32.partialorder %v1365, 0.0
        %vm1436 = vcmp.gt.f32.partialorder %v1367, 0.0
        %vm1437 = vcmp.gt.f32.partialorder %v1256, 0.0
        %vm1438 = vcmp.gt.f32.partialorder %v1258, 0.0
        %vm1439 = vcmp.gt.f32.partialorder %v1369, 0.0
        %vm1440 = vcmp.gt.f32.partialorder %v1371, 0.0
        %vm1441 = vcmp.gt.f32.partialorder %v1262, 0.0
        %vm1442 = vcmp.gt.f32.partialorder %v1264, 0.0
        %vm1443 = vcmp.gt.f32.partialorder %v1375, 0.0
        %vm1444 = vcmp.gt.f32.partialorder %v1377, 0.0
        %vm1445 = vcmp.gt.f32.partialorder %v1266, 0.0
        %vm1446 = vcmp.gt.f32.partialorder %v1268, 0.0
        %vm1447 = vcmp.gt.f32.partialorder %v1379, 0.0
        %vm1448 = vcmp.gt.f32.partialorder %v1381, 0.0
        %vm1449 = vcmp.gt.f32.partialorder %v1272, 0.0
        %vm1450 = vcmp.gt.f32.partialorder %v1274, 0.0
        %vm1451 = vcmp.gt.f32.partialorder %v1385, 0.0
        %vm1452 = vcmp.gt.f32.partialorder %v1387, 0.0
        %vm1453 = vcmp.gt.f32.partialorder %v1276, 0.0
        %vm1454 = vcmp.gt.f32.partialorder %v1278, 0.0
        %vm1455 = vcmp.gt.f32.partialorder %v1389, 0.0
        %vm1456 = vcmp.gt.f32.partialorder %v1391, 0.0
        %v1457 = vmul.f32 %v1202, 0.2
        %v1458 = vmul.f32 %v1204, 0.2
        %v1459 = vmul.f32 %v1315, 0.2
        %v1460 = vmul.f32 %v1317, 0.2
        %v1461 = vmul.f32 %v1206, 0.2
        %v1462 = vmul.f32 %v1208, 0.2
        %v1463 = vmul.f32 %v1319, 0.2
        %v1464 = vmul.f32 %v1321, 0.2
        %v1465 = vmul.f32 %v1212, 0.2
        %v1466 = vmul.f32 %v1214, 0.2
        %v1467 = vmul.f32 %v1325, 0.2
        %v1468 = vmul.f32 %v1327, 0.2
        %v1469 = vmul.f32 %v1216, 0.2
        %v1470 = vmul.f32 %v1218, 0.2
        %v1471 = vmul.f32 %v1329, 0.2
        %v1472 = vmul.f32 %v1331, 0.2
        %v1473 = vmul.f32 %v1222, 0.2
        %v1474 = vmul.f32 %v1224, 0.2
        %v1475 = vmul.f32 %v1335, 0.2
        %v1476 = vmul.f32 %v1337, 0.2
        %v1477 = vmul.f32 %v1226, 0.2
        %v1478 = vmul.f32 %v1228, 0.2
        %v1479 = vmul.f32 %v1339, 0.2
        %v1480 = vmul.f32 %v1341, 0.2
        %v1481 = vmul.f32 %v1232, 0.2
        %v1482 = vmul.f32 %v1234, 0.2
        %v1483 = vmul.f32 %v1345, 0.2
        %v1484 = vmul.f32 %v1347, 0.2
        %v1485 = vmul.f32 %v1236, 0.2
        %v1486 = vmul.f32 %v1238, 0.2
        %v1487 = vmul.f32 %v1349, 0.2
        %v1488 = vmul.f32 %v1351, 0.2
        %v1489 = vmul.f32 %v1242, 0.2
        %v1490 = vmul.f32 %v1244, 0.2
        %v1491 = vmul.f32 %v1355, 0.2
        %v1492 = vmul.f32 %v1357, 0.2
        %v1493 = vmul.f32 %v1246, 0.2
        %v1494 = vmul.f32 %v1248, 0.2
        %v1495 = vmul.f32 %v1359, 0.2
        %v1496 = vmul.f32 %v1361, 0.2
        %v1497 = vmul.f32 %v1252, 0.2
        %v1498 = vmul.f32 %v1254, 0.2
        %v1499 = vmul.f32 %v1365, 0.2
        %v1500 = vmul.f32 %v1367, 0.2
        %v1501 = vmul.f32 %v1256, 0.2
        %v1502 = vmul.f32 %v1258, 0.2
        %v1503 = vmul.f32 %v1369, 0.2
        %v1504 = vmul.f32 %v1371, 0.2
        %v1505 = vmul.f32 %v1262, 0.2
        %v1506 = vmul.f32 %v1264, 0.2
        %v1507 = vmul.f32 %v1375, 0.2
        %v1508 = vmul.f32 %v1377, 0.2
        %v1509 = vmul.f32 %v1266, 0.2
        %v1510 = vmul.f32 %v1268, 0.2
        %v1511 = vmul.f32 %v1379, 0.2
        %v1512 = vmul.f32 %v1381, 0.2
        %v1513 = vmul.f32 %v1272, 0.2
        %v1514 = vmul.f32 %v1274, 0.2
        %v1515 = vmul.f32 %v1385, 0.2
        %v1516 = vmul.f32 %v1387, 0.2
        %v1517 = vmul.f32 %v1276, 0.2
        %v1518 = vmul.f32 %v1278, 0.2
        %v1519 = vmul.f32 %v1389, 0.2
        %v1520 = vmul.f32 %v1391, 0.2
        %v1521 = vsel %vm1393, %v1202, %v1457
        %v1522 = vsel %vm1394, %v1204, %v1458
        %v1523 = vsel %vm1395, %v1315, %v1459
        %v1524 = vsel %vm1396, %v1317, %v1460
        %v1525 = vsel %vm1397, %v1206, %v1461
        %v1526 = vsel %vm1398, %v1208, %v1462
        %v1527 = vsel %vm1399, %v1319, %v1463
        %v1528 = vsel %vm1400, %v1321, %v1464
        %v1529 = vsel %vm1401, %v1212, %v1465
        %v1530 = vsel %vm1402, %v1214, %v1466
        %v1531 = vsel %vm1403, %v1325, %v1467
        %v1532 = vsel %vm1404, %v1327, %v1468
        %v1533 = vsel %vm1405, %v1216, %v1469
        %v1534 = vsel %vm1406, %v1218, %v1470
        %v1535 = vsel %vm1407, %v1329, %v1471
        %v1536 = vsel %vm1408, %v1331, %v1472
        %v1537 = vsel %vm1409, %v1222, %v1473
        %v1538 = vsel %vm1410, %v1224, %v1474
        %v1539 = vsel %vm1411, %v1335, %v1475
        %v1540 = vsel %vm1412, %v1337, %v1476
        %v1541 = vsel %vm1413, %v1226, %v1477
        %v1542 = vsel %vm1414, %v1228, %v1478
        %v1543 = vsel %vm1415, %v1339, %v1479
        %v1544 = vsel %vm1416, %v1341, %v1480
        %v1545 = vsel %vm1417, %v1232, %v1481
        %v1546 = vsel %vm1418, %v1234, %v1482
        %v1547 = vsel %vm1419, %v1345, %v1483
        %v1548 = vsel %vm1420, %v1347, %v1484
        %v1549 = vsel %vm1421, %v1236, %v1485
        %v1550 = vsel %vm1422, %v1238, %v1486
        %v1551 = vsel %vm1423, %v1349, %v1487
        %v1552 = vsel %vm1424, %v1351, %v1488
        %v1553 = vsel %vm1425, %v1242, %v1489
        %v1554 = vsel %vm1426, %v1244, %v1490
        %v1555 = vsel %vm1427, %v1355, %v1491
        %v1556 = vsel %vm1428, %v1357, %v1492
        %v1557 = vsel %vm1429, %v1246, %v1493
        %v1558 = vsel %vm1430, %v1248, %v1494
        %v1559 = vsel %vm1431, %v1359, %v1495
        %v1560 = vsel %vm1432, %v1361, %v1496
        %v1561 = vsel %vm1433, %v1252, %v1497
        %v1562 = vsel %vm1434, %v1254, %v1498
        %v1563 = vsel %vm1435, %v1365, %v1499
        %v1564 = vsel %vm1436, %v1367, %v1500
        %v1565 = vsel %vm1437, %v1256, %v1501
        %v1566 = vsel %vm1438, %v1258, %v1502
        %v1567 = vsel %vm1439, %v1369, %v1503
        %v1568 = vsel %vm1440, %v1371, %v1504
        %v1569 = vsel %vm1441, %v1262, %v1505
        %v1570 = vsel %vm1442, %v1264, %v1506
        %v1571 = vsel %vm1443, %v1375, %v1507
        %v1572 = vsel %vm1444, %v1377, %v1508
        %v1573 = vsel %vm1445, %v1266, %v1509
        %v1574 = vsel %vm1446, %v1268, %v1510
        %v1575 = vsel %vm1447, %v1379, %v1511
        %v1576 = vsel %vm1448, %v1381, %v1512
        %v1577 = vsel %vm1449, %v1272, %v1513
        %v1578 = vsel %vm1450, %v1274, %v1514
        %v1579 = vsel %vm1451, %v1385, %v1515
        %v1580 = vsel %vm1452, %v1387, %v1516
        %v1581 = vsel %vm1453, %v1276, %v1517
        %v1582 = vsel %vm1454, %v1278, %v1518
        %v1583 = vsel %vm1455, %v1389, %v1519
        %v1584 = vsel %vm1456, %v1391, %v1520
        %v1585 = vld [vmem:[%s5] sm:$0xff]
        %v1586 = vld [vmem:[%s5 + $0x8] sm:$0xff]
        %v1587 = vld [vmem:[%s5 + $0x10] sm:$0xff]
        %v1588 = vld [vmem:[%s5 + $0x18] sm:$0xff]
        %v1589 = vld [vmem:[%s5 + $0x20] sm:$0xff]
        %v1590 = vld [vmem:[%s5 + $0x28] sm:$0xff]
        %v1591 = vld [vmem:[%s5 + $0x30] sm:$0xff]
        %v1592 = vld [vmem:[%s5 + $0x38] sm:$0xff]
        %v1593 = vld [vmem:[%s5 + $0x40] sm:$0xff]
        %v1594 = vld [vmem:[%s5 + $0x48] sm:$0xff]
        %v1595 = vld [vmem:[%s5 + $0x50] sm:$0xff]
        %v1596 = vld [vmem:[%s5 + $0x58] sm:$0xff]
        %v1597 = vld [vmem:[%s5 + $0x60] sm:$0xff]
        %v1598 = vld [vmem:[%s5 + $0x68] sm:$0xff]
        %v1599 = vld [vmem:[%s5 + $0x70] sm:$0xff]
        %v1600 = vld [vmem:[%s5 + $0x78] sm:$0xff]
        %1602 = vset.pattern.permute.xlu0 0
        %1603 = vperm.xlu0 %1602, %v1585
        %v1604 = vpop.permute.xlu0 %1603
        %1607 = vset.pattern.permute.xlu0 0
        %1608 = vperm.xlu0 %1607, %v1586
        %v1609 = vpop.permute.xlu0 %1608
        %1612 = vset.pattern.permute.xlu0 0
        %1613 = vperm.xlu0 %1612, %v1587
        %v1614 = vpop.permute.xlu0 %1613
        %1617 = vset.pattern.permute.xlu0 0
        %1618 = vperm.xlu0 %1617, %v1588
        %v1619 = vpop.permute.xlu0 %1618
        %1622 = vset.pattern.permute.xlu0 0
        %1623 = vperm.xlu0 %1622, %v1589
        %v1624 = vpop.permute.xlu0 %1623
        %1627 = vset.pattern.permute.xlu0 0
        %1628 = vperm.xlu0 %1627, %v1590
        %v1629 = vpop.permute.xlu0 %1628
        %1632 = vset.pattern.permute.xlu0 0
        %1633 = vperm.xlu0 %1632, %v1591
        %v1634 = vpop.permute.xlu0 %1633
        %1637 = vset.pattern.permute.xlu0 0
        %1638 = vperm.xlu0 %1637, %v1592
        %v1639 = vpop.permute.xlu0 %1638
        %1642 = vset.pattern.permute.xlu0 0
        %1643 = vperm.xlu0 %1642, %v1593
        %v1644 = vpop.permute.xlu0 %1643
        %1647 = vset.pattern.permute.xlu0 0
        %1648 = vperm.xlu0 %1647, %v1594
        %v1649 = vpop.permute.xlu0 %1648
        %1652 = vset.pattern.permute.xlu0 0
        %1653 = vperm.xlu0 %1652, %v1595
        %v1654 = vpop.permute.xlu0 %1653
        %1657 = vset.pattern.permute.xlu0 0
        %1658 = vperm.xlu0 %1657, %v1596
        %v1659 = vpop.permute.xlu0 %1658
        %1662 = vset.pattern.permute.xlu0 0
        %1663 = vperm.xlu0 %1662, %v1597
        %v1664 = vpop.permute.xlu0 %1663
        %1667 = vset.pattern.permute.xlu0 0
        %1668 = vperm.xlu0 %1667, %v1598
        %v1669 = vpop.permute.xlu0 %1668
        %1672 = vset.pattern.permute.xlu0 0
        %1673 = vperm.xlu0 %1672, %v1599
        %v1674 = vpop.permute.xlu0 %1673
        %1677 = vset.pattern.permute.xlu0 0
        %1678 = vperm.xlu0 %1677, %v1600
        %v1679 = vpop.permute.xlu0 %1678
        %v1681 = vmul.f32 %v1521, %v1604
        %v1682 = vmul.f32 %v1522, %v1604
        %v1683 = vmul.f32 %v1523, %v1604
        %v1684 = vmul.f32 %v1524, %v1604
        %v1685 = vmul.f32 %v1525, %v1609
        %v1686 = vmul.f32 %v1526, %v1609
        %v1687 = vmul.f32 %v1527, %v1609
        %v1688 = vmul.f32 %v1528, %v1609
        %v1689 = vmul.f32 %v1529, %v1614
        %v1690 = vmul.f32 %v1530, %v1614
        %v1691 = vmul.f32 %v1531, %v1614
        %v1692 = vmul.f32 %v1532, %v1614
        %v1693 = vmul.f32 %v1533, %v1619
        %v1694 = vmul.f32 %v1534, %v1619
        %v1695 = vmul.f32 %v1535, %v1619
        %v1696 = vmul.f32 %v1536, %v1619
        %v1697 = vmul.f32 %v1537, %v1624
        %v1698 = vmul.f32 %v1538, %v1624
        %v1699 = vmul.f32 %v1539, %v1624
        %v1700 = vmul.f32 %v1540, %v1624
        %v1701 = vmul.f32 %v1541, %v1629
        %v1702 = vmul.f32 %v1542, %v1629
        %v1703 = vmul.f32 %v1543, %v1629
        %v1704 = vmul.f32 %v1544, %v1629
        %v1705 = vmul.f32 %v1545, %v1634
        %v1706 = vmul.f32 %v1546, %v1634
        %v1707 = vmul.f32 %v1547, %v1634
        %v1708 = vmul.f32 %v1548, %v1634
        %v1709 = vmul.f32 %v1549, %v1639
        %v1710 = vmul.f32 %v1550, %v1639
        %v1711 = vmul.f32 %v1551, %v1639
        %v1712 = vmul.f32 %v1552, %v1639
        %v1713 = vmul.f32 %v1553, %v1644
        %v1714 = vmul.f32 %v1554, %v1644
        %v1715 = vmul.f32 %v1555, %v1644
        %v1716 = vmul.f32 %v1556, %v1644
        %v1717 = vmul.f32 %v1557, %v1649
        %v1718 = vmul.f32 %v1558, %v1649
        %v1719 = vmul.f32 %v1559, %v1649
        %v1720 = vmul.f32 %v1560, %v1649
        %v1721 = vmul.f32 %v1561, %v1654
        %v1722 = vmul.f32 %v1562, %v1654
        %v1723 = vmul.f32 %v1563, %v1654
        %v1724 = vmul.f32 %v1564, %v1654
        %v1725 = vmul.f32 %v1565, %v1659
        %v1726 = vmul.f32 %v1566, %v1659
        %v1727 = vmul.f32 %v1567, %v1659
        %v1728 = vmul.f32 %v1568, %v1659
        %v1729 = vmul.f32 %v1569, %v1664
        %v1730 = vmul.f32 %v1570, %v1664
        %v1731 = vmul.f32 %v1571, %v1664
        %v1732 = vmul.f32 %v1572, %v1664
        %v1733 = vmul.f32 %v1573, %v1669
        %v1734 = vmul.f32 %v1574, %v1669
        %v1735 = vmul.f32 %v1575, %v1669
        %v1736 = vmul.f32 %v1576, %v1669
        %v1737 = vmul.f32 %v1577, %v1674
        %v1738 = vmul.f32 %v1578, %v1674
        %v1739 = vmul.f32 %v1579, %v1674
        %v1740 = vmul.f32 %v1580, %v1674
        %v1741 = vmul.f32 %v1581, %v1679
        %v1742 = vmul.f32 %v1582, %v1679
        %v1743 = vmul.f32 %v1583, %v1679
        %v1744 = vmul.f32 %v1584, %v1679
        %v1745 = vadd.f32 %v1681, %v1685
        %v1746 = vadd.f32 %v1745, %v1689
        %v1747 = vadd.f32 %v1746, %v1693
        %v1748 = vadd.f32 %v1747, %v1697
        %v1749 = vadd.f32 %v1748, %v1701
        %v1750 = vadd.f32 %v1749, %v1705
        %v1751 = vadd.f32 %v1750, %v1709
        %v1752 = vadd.f32 %v1751, %v1713
        %v1753 = vadd.f32 %v1752, %v1717
        %v1754 = vadd.f32 %v1753, %v1721
        %v1755 = vadd.f32 %v1754, %v1725
        %v1756 = vadd.f32 %v1755, %v1729
        %v1757 = vadd.f32 %v1756, %v1733
        %v1758 = vadd.f32 %v1757, %v1737
        %v1759 = vadd.f32 %v1758, %v1741
        %v1760 = vrot.slane %v1759, 4
        %v1761 = vadd.f32 %v1759, %v1760
        %v1762 = vrot.slane %v1761, 2
        %v1763 = vadd.f32 %v1761, %v1762
        %v1764 = vrot.slane %v1763, 1
        %v1765 = vadd.f32 %v1763, %v1764
        %v1766 = vadd.f32 %v1682, %v1686
        %v1767 = vadd.f32 %v1766, %v1690
        %v1768 = vadd.f32 %v1767, %v1694
        %v1769 = vadd.f32 %v1768, %v1698
        %v1770 = vadd.f32 %v1769, %v1702
        %v1771 = vadd.f32 %v1770, %v1706
        %v1772 = vadd.f32 %v1771, %v1710
        %v1773 = vadd.f32 %v1772, %v1714
        %v1774 = vadd.f32 %v1773, %v1718
        %v1775 = vadd.f32 %v1774, %v1722
        %v1776 = vadd.f32 %v1775, %v1726
        %v1777 = vadd.f32 %v1776, %v1730
        %v1778 = vadd.f32 %v1777, %v1734
        %v1779 = vadd.f32 %v1778, %v1738
        %v1780 = vadd.f32 %v1779, %v1742
        %v1781 = vrot.slane %v1780, 4
        %v1782 = vadd.f32 %v1780, %v1781
        %v1783 = vrot.slane %v1782, 2
        %v1784 = vadd.f32 %v1782, %v1783
        %v1785 = vrot.slane %v1784, 1
        %v1786 = vadd.f32 %v1784, %v1785
        %v1787 = vadd.f32 %v1683, %v1687
        %v1788 = vadd.f32 %v1787, %v1691
        %v1789 = vadd.f32 %v1788, %v1695
        %v1790 = vadd.f32 %v1789, %v1699
        %v1791 = vadd.f32 %v1790, %v1703
        %v1792 = vadd.f32 %v1791, %v1707
        %v1793 = vadd.f32 %v1792, %v1711
        %v1794 = vadd.f32 %v1793, %v1715
        %v1795 = vadd.f32 %v1794, %v1719
        %v1796 = vadd.f32 %v1795, %v1723
        %v1797 = vadd.f32 %v1796, %v1727
        %v1798 = vadd.f32 %v1797, %v1731
        %v1799 = vadd.f32 %v1798, %v1735
        %v1800 = vadd.f32 %v1799, %v1739
        %v1801 = vadd.f32 %v1800, %v1743
        %v1802 = vrot.slane %v1801, 4
        %v1803 = vadd.f32 %v1801, %v1802
        %v1804 = vrot.slane %v1803, 2
        %v1805 = vadd.f32 %v1803, %v1804
        %v1806 = vrot.slane %v1805, 1
        %v1807 = vadd.f32 %v1805, %v1806
        %v1808 = vadd.f32 %v1684, %v1688
        %v1809 = vadd.f32 %v1808, %v1692
        %v1810 = vadd.f32 %v1809, %v1696
        %v1811 = vadd.f32 %v1810, %v1700
        %v1812 = vadd.f32 %v1811, %v1704
        %v1813 = vadd.f32 %v1812, %v1708
        %v1814 = vadd.f32 %v1813, %v1712
        %v1815 = vadd.f32 %v1814, %v1716
        %v1816 = vadd.f32 %v1815, %v1720
        %v1817 = vadd.f32 %v1816, %v1724
        %v1818 = vadd.f32 %v1817, %v1728
        %v1819 = vadd.f32 %v1818, %v1732
        %v1820 = vadd.f32 %v1819, %v1736
        %v1821 = vadd.f32 %v1820, %v1740
        %v1822 = vadd.f32 %v1821, %v1744
        %v1823 = vrot.slane %v1822, 4
        %v1824 = vadd.f32 %v1822, %v1823
        %v1825 = vrot.slane %v1824, 2
        %v1826 = vadd.f32 %v1824, %v1825
        %v1827 = vrot.slane %v1826, 1
        %v1828 = vadd.f32 %v1826, %v1827
        %s1829 = sld [smem:[#allocation2]]
        %v1830 = vstv %s1829
        %v1831 = vadd.f32 %v1765, %v1830
        %v1832 = vadd.f32 %v1786, %v1830
        %v1833 = vadd.f32 %v1807, %v1830
        %v1834 = vadd.f32 %v1828, %v1830
        %v1835 = vxor.u32 %v1831, 2147483648
        %v1836 = vxor.u32 %v1832, 2147483648
        %v1837 = vxor.u32 %v1833, 2147483648
        %v1838 = vxor.u32 %v1834, 2147483648
        %v1839 = vmul.f32 %v1835, 1.442695
        %v1840 = vpow.pop %v1839
        %v1841 = vmul.f32 %v1836, 1.442695
        %v1842 = vpow.pop %v1841
        %v1843 = vmul.f32 %v1837, 1.442695
        %v1844 = vpow.pop %v1843
        %v1845 = vmul.f32 %v1838, 1.442695
        %v1846 = vpow.pop %v1845
        %v1847 = vadd.f32 %v1840, 1.0
        %v1848 = vadd.f32 %v1842, 1.0
        %v1849 = vadd.f32 %v1844, 1.0
        %v1850 = vadd.f32 %v1846, 1.0
        %v1851 = vrcp.pop %v1847
        %v1852 = vmul.f32 1.0, %v1851
        %v1853 = vrcp.pop %v1848
        %v1854 = vmul.f32 1.0, %v1853
        %v1855 = vrcp.pop %v1849
        %v1856 = vmul.f32 1.0, %v1855
        %v1857 = vrcp.pop %v1850
        %v1858 = vmul.f32 1.0, %v1857
        %v1863 = vcombine.low %v1852, %v1854
        %v1864 = vcombine.low %v1856, %v1858
        %v1866 = vunpack.c.l.s4 1966171168
        %v1867 = vunpack.c.0.s8 %v1866
        %v1868 = vlaneseq
        %v1869 = vshrl.u32 %v1868, 7
        %v1870 = vsub.s32 %v1867, %v1869
        %v1871 = vrot.slane %v1863, %v1870
        %v1873 = vunpack.c.l.s4 1966171168
        %v1874 = vunpack.c.0.s8 %v1873
        %v1875 = vlaneseq
        %v1876 = vshrl.u32 %v1875, 7
        %v1877 = vsub.s32 %v1874, %v1876
        %v1878 = vrot.slane %v1864, %v1877
        %v1879 = vcombine.low %v1871, %v1878
        %v1881 = vunpack.c.l.s4 1966171168
        %v1882 = vunpack.c.0.s8 %v1881
        %v1883 = vlaneseq
        %v1884 = vshrl.u32 %v1883, 7
        %v1885 = vsub.s32 %v1882, %v1884
        %v1886 = vrot.slane %v1879, %v1885
        %v1888 = vlaneseq
        %vm1889 = vcmp.ge.s32.totalorder %v1888, 0
        %vm1890 = vcmp.lt.s32.totalorder %v1888, 512
        %vm1891 = vmand %vm1889, %vm1890
        %1892 = vst.msk [vmem:[%s297] sm:$0xf] %vm1891, %v1886
        %s1893 = sand.u32 %s185, 1
        %s1894 = scalar_lea.sflag [#allocation5], %s1893
        %s1895 = sand.u32 %s185, 1
        %s1896 = smul.addr %s1895, 4
        %s1897 = scalar_lea.vmem [#allocation6], %s1896
        // Predicated region
        $region53: #{tpu_custom_call.1} parent=47 // pred_check
          %p1898 = pneg %p195
        $region54: #{tpu_custom_call.1} parent=47 // pred_check_branch
          %1900 = sbr.rel (%p1898) target = $region56
        $region55: #{tpu_custom_call.1} parent=47 // pred_region
          %s1901 = smul.u32 4, %s25
          %s1903 = ssub.s32 64, 64
          %1904 = vsyncadd %s1894, %s1903
          %s1905 = smul.addr %s1901, 16
          %s1906 = scalar_lea.hbm %s7, %s1905
          %s1908 = sshll.u32 %s1897, 4
          %s1909 = int_to_ptr.vmem [resolvable:$true] %s1908
          %1911 = dma.vmem_to_hbm [thread:$0]  %s1909, 64, %s1906, %s1894
        $region56: #{tpu_custom_call.1} parent=47 // pred_fallthru
          _
      $region48: #{tpu_custom_call.1} parent=5 // pred_fallthru
        _
      %p1912 = scmp.le.s32.totalorder 2, %s20
      // Predicated region
      $region57: #{tpu_custom_call.1} parent=5 // pred_check
        %p1913 = pneg %p1912
      $region58: #{tpu_custom_call.1} parent=5 // pred_check_branch
        %1915 = sbr.rel (%p1913) target = $region60
      $region59: #{tpu_custom_call.1} parent=5 // pred_region
        %s1916 = ssub.s32 %s20, 2
        // Predicated region
        $region61: #{tpu_custom_call.1} parent=59 // pred_check
          %p1917 = pneg %p201
        $region62: #{tpu_custom_call.1} parent=59 // pred_check_branch
          %1919 = sbr.rel (%p1917) target = $region64
        $region63: #{tpu_custom_call.1} parent=59 // pred_region
          %s1920 = sand.u32 %s186, 1
          %s1921 = scalar_lea.sflag [#allocation5], %s1920
          %s1922 = sand.u32 %s186, 1
          %s1923 = smul.addr %s1922, 4
          %s1924 = scalar_lea.vmem [#allocation6], %s1923
          %1925 = dma.done %s1921, 64
        $region64: #{tpu_custom_call.1} parent=59 // pred_fallthru
          _
      $region60: #{tpu_custom_call.1} parent=5 // pred_fallthru
        _
    $region6: #{tpu_custom_call.1} parent=1 // loop_footer
      %s24 = sadd.s32 1, %s20
    $region7: #{tpu_custom_call.1} parent=1 // loop_footer_branch
      %19 = sbr.rel target = $region3
    $region8: #{tpu_custom_call.1} parent=1 // loop_exit
      _
    %1926 = vsyncpa [#allocation4], 1
    %s1927 = scalar_lea.sflag [#allocation4], 1
    %1928 = vsyncpa %s1927, 1
    %1929 = vsyncpa [#allocation5], 1
    %s1930 = scalar_lea.sflag [#allocation5], 1
    %1931 = vsyncpa %s1930, 1

</llo_original>
